<compile_context>
chip_gen: v6e
topology: v6e:2x2x1
jax: 0.10.0
libtpu: 0.0.40
codegen_flags: <defaults>
</compile_context>

<pallas_src>
import functools  # noqa: F401  (kept for parity with common kernel style)

import jax
import jax.numpy as jnp
from jax import lax
from jax.experimental import pallas as pl
from jax.experimental.pallas import tpu as pltpu

LN_EPS = 1e-5            # torch.nn.LayerNorm default eps
MASK_VALUE = -1e30       # finite "-inf" so the online softmax never sees NaN


# -----------------------------------------------------------------------------
# RoPE tables (glue, plain JAX)
# -----------------------------------------------------------------------------
# TODO(synk): RotaryPositionalEmbedding / apply_rotary are not defined in the
# provided source; the standard rotate-half (GPT-NeoX style) RoPE is used.
def rope_tables(seq_len, dim):
    inv_freq = 1.0 / (10000.0 ** (jnp.arange(0, dim, 2, dtype=jnp.float32) / dim))
    t = jnp.arange(seq_len, dtype=jnp.float32)
    freqs = jnp.outer(t, inv_freq)                    # (S, dim//2)
    emb = jnp.concatenate([freqs, freqs], axis=-1)    # (S, dim)
    return jnp.sin(emb), jnp.cos(emb)


def _signed_sin(sin, dim):
    """Fold rotate-half's [-1,...,-1,+1,...,+1] sign into the sin table."""
    half = dim // 2
    sign = jnp.concatenate([-jnp.ones((half,), jnp.float32),
                            jnp.ones((half,), jnp.float32)])
    return sin * sign


def _swap_halves(v):
    # rotate_half(v) == _swap_halves(v) * sign, with sign folded into sin.
    d = v.shape[-1]
    return jnp.concatenate([v[:, d // 2:], v[:, :d // 2]], axis=-1)


# -----------------------------------------------------------------------------
# Flash-style Pallas kernel
#   grid = (B, num_q_tiles, num_kv_tiles); kv is the inner reduction axis.
# -----------------------------------------------------------------------------
def _mla_flash_kernel(
    plen_ref,                                   # scalar prefetch: past_length (SMEM, (1,))
    xq_ref, xkv_ref,                            # x at q rows / kv rows
    w_dkv_t_ref, ln_w_ref, ln_b_ref,
    w_kr_t_ref, w_qr_t_ref, b_qr_ref,
    absorbed_k_ref, w_uv_ref, w_o_t_ref,
    sin_kq_ref, cos_kq_ref, sin_qq_ref, cos_qq_ref,
    sin_kkv_ref, cos_kkv_ref,
    out_ref, ckv_ref, kr_ref,                   # outputs
    qcat_scr, m_scr, l_scr, acc_scr,            # scratch
):
    qi = pl.program_id(1)
    ki = pl.program_id(2)
    nkv = pl.num_programs(2)
    past = plen_ref[0]

    tq = xq_ref.shape[1]
    tk = xkv_ref.shape[1]
    E = xq_ref.shape[2]
    L = w_dkv_t_ref.shape[1]
    scale = 1.0 / float((2.0 * L) ** 0.5)       # folded into the q-side operand
    bf16 = jnp.bfloat16

    def _latent_ln(xb):
        # c_kv = LayerNorm(x @ W_dkv^T); matmul in bf16, LN math in f32.
        c = jnp.dot(xb, w_dkv_t_ref[...], preferred_element_type=jnp.float32)
        mu = jnp.mean(c, axis=-1, keepdims=True)
        var = jnp.mean(jnp.square(c - mu), axis=-1, keepdims=True)
        return (c - mu) * lax.rsqrt(var + LN_EPS) * ln_w_ref[...] + ln_b_ref[...]

    def _rope_k(xb, sin_ref, cos_ref):
        k = jnp.dot(xb, w_kr_t_ref[...], preferred_element_type=jnp.float32)
        return k * cos_ref[...] + _swap_halves(k) * sin_ref[...]

    # ---- per-q-tile init (also produces the c_kv / k_r outputs for q rows) ----
    @pl.when(ki == 0)
    def _init():
        xq_b = xq_ref[0].astype(bf16)                                    # (tq, E)
        ckv_q = _latent_ln(xq_b)                                         # (tq, L)
        ckv_ref[0] = ckv_q.astype(ckv_ref.dtype)
        kr_ref[0] = _rope_k(xq_b, sin_kq_ref, cos_kq_ref).astype(kr_ref.dtype)

        # q_r = RoPE(c_kv @ W_q_rope^T + b) ; a = x @ absorbed_k
        q = jnp.dot(ckv_q.astype(bf16), w_qr_t_ref[...],
                    preferred_element_type=jnp.float32) + b_qr_ref[...]  # (tq, E)
        q_r = q * cos_qq_ref[...] + _swap_halves(q) * sin_qq_ref[...]
        a = jnp.dot(xq_b, absorbed_k_ref[...],
                    preferred_element_type=jnp.float32)                  # (tq, L)
        # fused, pre-scaled query-side operand for the single score matmul
        qcat_scr[...] = jnp.concatenate([a * scale, q_r * scale],
                                        axis=-1).astype(bf16)            # (tq, L+E)

        m_scr[...] = jnp.full_like(m_scr, MASK_VALUE)
        l_scr[...] = jnp.zeros_like(l_scr)
        acc_scr[...] = jnp.zeros_like(acc_scr)

    # ---- kv-tile update (skipped when the tile is fully causally masked) ----
    kv_start = ki * tk
    q_end = qi * tq + (tq - 1)

    @pl.when(kv_start <= q_end + past)
    def _attend():
        xkv_b = xkv_ref[0].astype(bf16)                                  # (tk, E)
        ckv_kv = _latent_ln(xkv_b)                                       # (tk, L)
        kr_kv = _rope_k(xkv_b, sin_kkv_ref, cos_kkv_ref)                 # (tk, L)
        kcat = jnp.concatenate([ckv_kv, kr_kv], axis=-1).astype(bf16)    # (tk, L+E)

        # scores tile: one fused contraction over K = L+E, no transpose.
        s = lax.dot_general(qcat_scr[...], kcat,
                            dimension_numbers=(((1,), (1,)), ((), ())),
                            preferred_element_type=jnp.float32)          # (tq, tk)

        row = qi * tq + lax.broadcasted_iota(jnp.int32, (tq, tk), 0)
        col = kv_start + lax.broadcasted_iota(jnp.int32, (tq, tk), 1)
        s = jnp.where(col <= row + past, s, MASK_VALUE)

        m_prev = m_scr[...]
        m_new = jnp.maximum(m_prev, jnp.max(s, axis=-1, keepdims=True))
        alpha = jnp.exp(m_prev - m_new)
        p = jnp.exp(s - m_new)
        l_scr[...] = alpha * l_scr[...] + jnp.sum(p, axis=-1, keepdims=True)

        value = jnp.dot(ckv_kv.astype(bf16), w_uv_ref[...],
                        preferred_element_type=jnp.float32)              # (tk, E)
        acc_scr[...] = alpha * acc_scr[...] + jnp.dot(
            p.astype(bf16), value.astype(bf16),
            preferred_element_type=jnp.float32)
        m_scr[...] = m_new

    # ---- finalize: normalize and apply the output projection ----
    @pl.when(ki == nkv - 1)
    def _finalize():
        inv_l = pl.reciprocal(l_scr[...], approx=True)
        o = (acc_scr[...] * inv_l).astype(bf16)                          # (tq, E)
        out = jnp.dot(o, w_o_t_ref[...], preferred_element_type=jnp.float32)
        out_ref[0] = out.astype(out_ref.dtype)


# -----------------------------------------------------------------------------
# Wrapper (glue: weight transposes/casts, absorbed_k precompute, RoPE tables)
# -----------------------------------------------------------------------------
def latent_self_attention(x, params, past_length=0, *, q_tile=128, kv_tile=128):
    B, S, E = x.shape
    L = params["w_dkv"].shape[0]
    assert E == L, "q_r @ k_r^T requires embd_dim == kv_latent_dim (as in torch)"
    assert L % 2 == 0 and E % 2 == 0, "RoPE requires even dimensions"

    tq = min(q_tile, S)
    tk = min(kv_tile, S)
    assert S % tq == 0 and S % tk == 0, "seq_len must divide into tiles"
    nq, nk = S // tq, S // tk

    bf16 = jnp.bfloat16
    f32 = jnp.float32

    # Weights: pre-transposed so all in-kernel matmuls are row-major; bf16 for MXU.
    w_dkv_t = params["w_dkv"].T.astype(bf16)                  # (E, L)
    w_kr_t = params["w_k_rope"].T.astype(bf16)                # (E, L)
    w_qr_t = params["w_q_rope"].T.astype(bf16)                # (L, E)
    b_qr = params["b_q_rope"][None, :].astype(f32)            # (1, E)
    absorbed_k = (params["w_q"] @ params["w_uk"].T).astype(bf16)   # (E, L)
    w_uv = params["w_uv"].astype(bf16)                        # (L, E), used raw as in torch
    w_o_t = params["w_o"].T.astype(bf16)                      # (E, E)
    ln_w = params["ln_w"][None, :].astype(f32)                # (1, L)
    ln_b = params["ln_b"][None, :].astype(f32)                # (1, L)

    sin_k, cos_k = rope_tables(S, L)
    sin_q, cos_q = rope_tables(S, E)
    sin_k_eff = _signed_sin(sin_k, L)     # rotate-half sign folded into the table
    sin_q_eff = _signed_sin(sin_q, E)

    plen = jnp.asarray([past_length], jnp.int32)   # scalar-prefetch arg (SMEM)

    def w_spec(shape):
        return pl.BlockSpec(shape, lambda b, qi, ki, pl_: (0, 0))

    def qrow_spec(width):
        return pl.BlockSpec((tq, width), lambda b, qi, ki, pl_: (qi, 0))

    def krow_spec(width):
        return pl.BlockSpec((tk, width), lambda b, qi, ki, pl_: (ki, 0))

    in_specs = [
        pl.BlockSpec((1, tq, E), lambda b, qi, ki, pl_: (b, qi, 0)),   # x  (q rows)
        pl.BlockSpec((1, tk, E), lambda b, qi, ki, pl_: (b, ki, 0)),   # x  (kv rows)
        w_spec((E, L)),   # w_dkv_t
        w_spec((1, L)),   # ln_w
        w_spec((1, L)),   # ln_b
        w_spec((E, L)),   # w_kr_t
        w_spec((L, E)),   # w_qr_t
        w_spec((1, E)),   # b_qr
        w_spec((E, L)),   # absorbed_k
        w_spec((L, E)),   # w_uv
        w_spec((E, E)),   # w_o_t
        qrow_spec(L), qrow_spec(L),   # sin_k / cos_k at q rows
        qrow_spec(E), qrow_spec(E),   # sin_q / cos_q at q rows
        krow_spec(L), krow_spec(L),   # sin_k / cos_k at kv rows
    ]
    out_specs = [
        pl.BlockSpec((1, tq, E), lambda b, qi, ki, pl_: (b, qi, 0)),   # out
        pl.BlockSpec((1, tq, L), lambda b, qi, ki, pl_: (b, qi, 0)),   # c_kv
        pl.BlockSpec((1, tq, L), lambda b, qi, ki, pl_: (b, qi, 0)),   # k_r
    ]
    scratch_shapes = [
        pltpu.VMEM((tq, L + E), jnp.bfloat16),   # fused, pre-scaled [a | q_r]
        pltpu.VMEM((tq, 1), jnp.float32),        # m (running max)
        pltpu.VMEM((tq, 1), jnp.float32),        # l (running denom)
        pltpu.VMEM((tq, E), jnp.float32),        # acc
    ]

    out, c_kv, k_r = pl.pallas_call(
        _mla_flash_kernel,
        out_shape=(
            jax.ShapeDtypeStruct((B, S, E), x.dtype),
            jax.ShapeDtypeStruct((B, S, L), x.dtype),
            jax.ShapeDtypeStruct((B, S, L), x.dtype),
        ),
        grid_spec=pltpu.PrefetchScalarGridSpec(
            num_scalar_prefetch=1,
            grid=(B, nq, nk),
            in_specs=in_specs,
            out_specs=out_specs,
            scratch_shapes=scratch_shapes,
        ),
        compiler_params=pltpu.CompilerParams(
            dimension_semantics=("parallel", "parallel", "arbitrary")),
    )(plen, x, x, w_dkv_t, ln_w, ln_b, w_kr_t, w_qr_t, b_qr,
      absorbed_k, w_uv, w_o_t,
      sin_k_eff, cos_k, sin_q_eff, cos_q, sin_k_eff, cos_k)
    return out, c_kv, k_r


# -----------------------------------------------------------------------------
# Pure-JAX reference (mirrors the PyTorch forward, kv_cache=None path; f32)
# -----------------------------------------------------------------------------
def _rot_half(v):
    d = v.shape[-1]
    return jnp.concatenate([-v[..., d // 2:], v[..., :d // 2]], axis=-1)


def reference(x, params, past_length=0):
    B, S, E = x.shape
    L = params["w_dkv"].shape[0]
    absorbed = params["w_q"] @ params["w_uk"].T
    c = x @ params["w_dkv"].T
    mu = c.mean(-1, keepdims=True)
    var = ((c - mu) ** 2).mean(-1, keepdims=True)
    c_kv = (c - mu) / jnp.sqrt(var + LN_EPS) * params["ln_w"] + params["ln_b"]
    k = x @ params["w_k_rope"].T
    sin_k, cos_k = rope_tables(S, L)
    k_r = k * cos_k + _rot_half(k) * sin_k
    q = c_kv @ params["w_q_rope"].T + params["b_q_rope"]
    sin_q, cos_q = rope_tables(S, E)
    q_r = q * cos_q + _rot_half(q) * sin_q
    s1 = jnp.einsum("bse,el,btl->bst", x, absorbed, c_kv)
    s2 = jnp.einsum("bse,bte->bst", q_r, k_r)
    scores = (s1 + s2) / jnp.sqrt(2.0 * L)
    row = jnp.arange(S)[:, None]
    col = jnp.arange(S)[None, :]
    scores = jnp.where(col <= row + past_length, scores, -jnp.inf)
    w = jax.nn.softmax(scores, axis=-1)
    value = c_kv @ params["w_uv"]
    out = (w @ value) @ params["w_o"].T
    return out, c_kv, k_r


def init_params(key, E, L):
    ks = jax.random.split(key, 8)
    s = 0.05
    return dict(
        w_q=jax.random.normal(ks[0], (E, E), jnp.float32) * s,
        w_dkv=jax.random.normal(ks[1], (L, E), jnp.float32) * s,
        w_uk=jax.random.normal(ks[2], (L, E), jnp.float32) * s,
        w_uv=jax.random.normal(ks[3], (L, E), jnp.float32) * s,
        w_o=jax.random.normal(ks[4], (E, E), jnp.float32) * s,
        w_k_rope=jax.random.normal(ks[5], (L, E), jnp.float32) * s,
        w_q_rope=jax.random.normal(ks[6], (E, L), jnp.float32) * s,
        b_q_rope=jax.random.normal(ks[7], (E,), jnp.float32) * s,
        ln_w=jnp.ones((L,), jnp.float32),
        ln_b=jnp.zeros((L,), jnp.float32),
    )


if __name__ == "__main__":
    # Module requires embd_dim == kv_latent_dim (q_r @ k_r^T) and even dims (RoPE).
    B, S, E, L = 2, 16, 32, 32
    key = jax.random.PRNGKey(0)
    kx, kp = jax.random.split(key)
    x = jax.random.normal(kx, (B, S, E), jnp.float32)
    params = init_params(kp, E, L)

    ref_out, ref_ckv, ref_kr = reference(x, params, past_length=0)

    # bf16 matmul operands (f32 accumulation) -> loose-ish tolerance vs f32 ref.
    TOL = dict(atol=2e-2, rtol=2e-2)

    # 1) Single-tile path (tq = tk = S).
    out, c_kv, k_r = latent_self_attention(x, params, past_length=0)
    jax.block_until_ready((out, c_kv, k_r))
    assert jnp.allclose(out, ref_out, **TOL)
    assert jnp.allclose(c_kv, ref_ckv, **TOL)
    assert jnp.allclose(k_r, ref_kr, **TOL)

    # 2) Multi-tile flash path (2 q tiles x 2 kv tiles): exercises the online
    #    softmax accumulator and the causal kv-tile skip.
    out2, c_kv2, k_r2 = latent_self_attention(
        x, params, past_length=0, q_tile=8, kv_tile=8)
    jax.block_until_ready((out2, c_kv2, k_r2))
    assert jnp.allclose(out2, ref_out, **TOL)
    assert jnp.allclose(c_kv2, ref_ckv, **TOL)
    assert jnp.allclose(k_r2, ref_kr, **TOL)

    print("KERNEL_OK")
</pallas_src>

<mosaic_0001>
module attributes {stable_mosaic.version = 11 : i64} {
  func.func @_mla_flash_kernel(%arg0: i32, %arg1: i32, %arg2: i32, %arg3: memref<1xi32, #tpu.memory_space<smem>>, %arg4: memref<1x16x32xf32, #tpu.memory_space<vmem>>, %arg5: memref<1x16x32xf32, #tpu.memory_space<vmem>>, %arg6: memref<32x32xbf16, #tpu.memory_space<vmem>>, %arg7: memref<1x32xf32, #tpu.memory_space<vmem>>, %arg8: memref<1x32xf32, #tpu.memory_space<vmem>>, %arg9: memref<32x32xbf16, #tpu.memory_space<vmem>>, %arg10: memref<32x32xbf16, #tpu.memory_space<vmem>>, %arg11: memref<1x32xf32, #tpu.memory_space<vmem>>, %arg12: memref<32x32xbf16, #tpu.memory_space<vmem>>, %arg13: memref<32x32xbf16, #tpu.memory_space<vmem>>, %arg14: memref<32x32xbf16, #tpu.memory_space<vmem>>, %arg15: memref<16x32xf32, #tpu.memory_space<vmem>>, %arg16: memref<16x32xf32, #tpu.memory_space<vmem>>, %arg17: memref<16x32xf32, #tpu.memory_space<vmem>>, %arg18: memref<16x32xf32, #tpu.memory_space<vmem>>, %arg19: memref<16x32xf32, #tpu.memory_space<vmem>>, %arg20: memref<16x32xf32, #tpu.memory_space<vmem>>, %arg21: memref<1x16x32xf32, #tpu.memory_space<vmem>>, %arg22: memref<1x16x32xf32, #tpu.memory_space<vmem>>, %arg23: memref<1x16x32xf32, #tpu.memory_space<vmem>>, %arg24: memref<16x64xbf16, #tpu.memory_space<vmem>>, %arg25: memref<16x1xf32, #tpu.memory_space<vmem>>, %arg26: memref<16x1xf32, #tpu.memory_space<vmem>>, %arg27: memref<16x32xf32, #tpu.memory_space<vmem>>) attributes {dimension_semantics = [#tpu.dimension_semantics<parallel>, #tpu.dimension_semantics<parallel>, #tpu.dimension_semantics<arbitrary>], iteration_bounds = array<i64: 2, 1, 1>, scalar_prefetch = 1 : i64, scratch_operands = 4 : i64, tpu.core_type = #tpu.core_type<tc>, window_params = [{transform_indices = @transform_0, window_bounds = array<i64: 1, 16, 32>}, {transform_indices = @transform_1, window_bounds = array<i64: 1, 16, 32>}, {pipeline_mode = #tpu.pipeline_mode<synchronous>, transform_indices = @transform_2, window_bounds = array<i64: 32, 32>}, {pipeline_mode = #tpu.pipeline_mode<synchronous>, transform_indices = @transform_3, window_bounds = array<i64: 1, 32>}, {pipeline_mode = #tpu.pipeline_mode<synchronous>, transform_indices = @transform_4, window_bounds = array<i64: 1, 32>}, {pipeline_mode = #tpu.pipeline_mode<synchronous>, transform_indices = @transform_5, window_bounds = array<i64: 32, 32>}, {pipeline_mode = #tpu.pipeline_mode<synchronous>, transform_indices = @transform_6, window_bounds = array<i64: 32, 32>}, {pipeline_mode = #tpu.pipeline_mode<synchronous>, transform_indices = @transform_7, window_bounds = array<i64: 1, 32>}, {pipeline_mode = #tpu.pipeline_mode<synchronous>, transform_indices = @transform_8, window_bounds = array<i64: 32, 32>}, {pipeline_mode = #tpu.pipeline_mode<synchronous>, transform_indices = @transform_9, window_bounds = array<i64: 32, 32>}, {pipeline_mode = #tpu.pipeline_mode<synchronous>, transform_indices = @transform_10, window_bounds = array<i64: 32, 32>}, {transform_indices = @transform_11, window_bounds = array<i64: 16, 32>}, {transform_indices = @transform_12, window_bounds = array<i64: 16, 32>}, {transform_indices = @transform_13, window_bounds = array<i64: 16, 32>}, {transform_indices = @transform_14, window_bounds = array<i64: 16, 32>}, {transform_indices = @transform_15, window_bounds = array<i64: 16, 32>}, {transform_indices = @transform_16, window_bounds = array<i64: 16, 32>}, {transform_indices = @transform_17, window_bounds = array<i64: 1, 16, 32>}, {transform_indices = @transform_18, window_bounds = array<i64: 1, 16, 32>}, {transform_indices = @transform_19, window_bounds = array<i64: 1, 16, 32>}]} {
    %c0 = arith.constant 0 : index
    %0 = memref.load %arg3[%c0] : memref<1xi32, #tpu.memory_space<smem>>
    %c0_i32 = arith.constant 0 : i32
    %1 = arith.cmpi eq, %arg2, %c0_i32 : i32
    %2 = arith.extui %1 : i1 to i32
    %c0_i32_0 = arith.constant 0 : i32
    %3 = arith.cmpi ne, %2, %c0_i32_0 : i32
    scf.if %3 {
      %c0_5 = arith.constant 0 : index
      %c0_6 = arith.constant 0 : index
      %c0_7 = arith.constant 0 : index
      %14 = vector.load %arg4[%c0_5, %c0_6, %c0_7] : memref<1x16x32xf32, #tpu.memory_space<vmem>>, vector<1x16x32xf32>
      %15 = vector.shape_cast %14 : vector<1x16x32xf32> to vector<16x32xf32>
      %16 = arith.truncf %15 : vector<16x32xf32> to vector<16x32xbf16>
      %c0_8 = arith.constant 0 : index
      %c0_9 = arith.constant 0 : index
      %17 = vector.load %arg6[%c0_8, %c0_9] : memref<32x32xbf16, #tpu.memory_space<vmem>>, vector<32x32xbf16>
      %cst = arith.constant dense<0.000000e+00> : vector<16x32xf32>
      %18 = tpu.matmul %16, %17, %cst {dimension_numbers = #tpu.dot_dimension_numbers<[1], [0], [0], [1], [0, 0, 1, 1], [], []>} : vector<16x32xbf16>, vector<32x32xbf16>, vector<16x32xf32> -> vector<16x32xf32>
      %cst_10 = arith.constant dense<0.000000e+00> : vector<16xf32>
      %19 = vector.multi_reduction <add>, %18, %cst_10 [1] : vector<16x32xf32> to vector<16xf32>
      %20 = vector.shape_cast %19 : vector<16xf32> to vector<16x1xf32>
      %cst_11 = arith.constant 3.200000e+01 : f32
      %21 = vector.broadcast %cst_11 : f32 to vector<16x1xf32>
      %22 = arith.divf %20, %21 : vector<16x1xf32>
      %23 = vector.broadcast %22 : vector<16x1xf32> to vector<16x32xf32>
      %24 = arith.subf %18, %23 : vector<16x32xf32>
      %25 = arith.mulf %24, %24 : vector<16x32xf32>
      %cst_12 = arith.constant dense<0.000000e+00> : vector<16xf32>
      %26 = vector.multi_reduction <add>, %25, %cst_12 [1] : vector<16x32xf32> to vector<16xf32>
      %27 = vector.shape_cast %26 : vector<16xf32> to vector<16x1xf32>
      %cst_13 = arith.constant 3.200000e+01 : f32
      %28 = vector.broadcast %cst_13 : f32 to vector<16x1xf32>
      %29 = arith.divf %27, %28 : vector<16x1xf32>
      %30 = vector.broadcast %22 : vector<16x1xf32> to vector<16x32xf32>
      %31 = arith.subf %18, %30 : vector<16x32xf32>
      %cst_14 = arith.constant 9.99999974E-6 : f32
      %32 = vector.broadcast %cst_14 : f32 to vector<16x1xf32>
      %33 = arith.addf %29, %32 : vector<16x1xf32>
      %34 = math.rsqrt %33 : vector<16x1xf32>
      %35 = vector.broadcast %34 : vector<16x1xf32> to vector<16x32xf32>
      %36 = arith.mulf %31, %35 : vector<16x32xf32>
      %c0_15 = arith.constant 0 : index
      %c0_16 = arith.constant 0 : index
      %37 = vector.load %arg7[%c0_15, %c0_16] : memref<1x32xf32, #tpu.memory_space<vmem>>, vector<1x32xf32>
      %38 = vector.broadcast %37 : vector<1x32xf32> to vector<16x32xf32>
      %39 = arith.mulf %36, %38 : vector<16x32xf32>
      %c0_17 = arith.constant 0 : index
      %c0_18 = arith.constant 0 : index
      %40 = vector.load %arg8[%c0_17, %c0_18] : memref<1x32xf32, #tpu.memory_space<vmem>>, vector<1x32xf32>
      %41 = vector.broadcast %40 : vector<1x32xf32> to vector<16x32xf32>
      %42 = arith.addf %39, %41 : vector<16x32xf32>
      %c0_19 = arith.constant 0 : index
      %c0_20 = arith.constant 0 : index
      %c0_21 = arith.constant 0 : index
      %43 = vector.load %arg22[%c0_19, %c0_20, %c0_21] : memref<1x16x32xf32, #tpu.memory_space<vmem>>, vector<1x16x32xf32>
      %44 = vector.shape_cast %43 : vector<1x16x32xf32> to vector<16x32xf32>
      %45 = vector.shape_cast %42 : vector<16x32xf32> to vector<1x16x32xf32>
      tpu.vector_store %arg22[%c0_19, %c0_20, %c0_21], %45 {strides = array<i32>} : memref<1x16x32xf32, #tpu.memory_space<vmem>>, vector<1x16x32xf32>,
      %c0_22 = arith.constant 0 : index
      %c0_23 = arith.constant 0 : index
      %46 = vector.load %arg9[%c0_22, %c0_23] : memref<32x32xbf16, #tpu.memory_space<vmem>>, vector<32x32xbf16>
      %cst_24 = arith.constant dense<0.000000e+00> : vector<16x32xf32>
      %47 = tpu.matmul %16, %46, %cst_24 {dimension_numbers = #tpu.dot_dimension_numbers<[1], [0], [0], [1], [0, 0, 1, 1], [], []>} : vector<16x32xbf16>, vector<32x32xbf16>, vector<16x32xf32> -> vector<16x32xf32>
      %c0_25 = arith.constant 0 : index
      %c0_26 = arith.constant 0 : index
      %48 = vector.load %arg16[%c0_25, %c0_26] : memref<16x32xf32, #tpu.memory_space<vmem>>, vector<16x32xf32>
      %49 = arith.mulf %47, %48 : vector<16x32xf32>
      %50 = vector.extract_strided_slice %47 {offsets = [0, 16], sizes = [16, 16], strides = [1, 1]} : vector<16x32xf32> to vector<16x16xf32>
      %51 = vector.extract_strided_slice %47 {offsets = [0, 0], sizes = [16, 16], strides = [1, 1]} : vector<16x32xf32> to vector<16x16xf32>
      %52 = tpu.concatenate %50, %51 in 1 : vector<16x16xf32>, vector<16x16xf32> -> vector<16x32xf32>
      %c0_27 = arith.constant 0 : index
      %c0_28 = arith.constant 0 : index
      %53 = vector.load %arg15[%c0_27, %c0_28] : memref<16x32xf32, #tpu.memory_space<vmem>>, vector<16x32xf32>
      %54 = arith.mulf %52, %53 : vector<16x32xf32>
      %55 = arith.addf %49, %54 : vector<16x32xf32>
      %c0_29 = arith.constant 0 : index
      %c0_30 = arith.constant 0 : index
      %c0_31 = arith.constant 0 : index
      %56 = vector.load %arg23[%c0_29, %c0_30, %c0_31] : memref<1x16x32xf32, #tpu.memory_space<vmem>>, vector<1x16x32xf32>
      %57 = vector.shape_cast %56 : vector<1x16x32xf32> to vector<16x32xf32>
      %58 = vector.shape_cast %55 : vector<16x32xf32> to vector<1x16x32xf32>
      tpu.vector_store %arg23[%c0_29, %c0_30, %c0_31], %58 {strides = array<i32>} : memref<1x16x32xf32, #tpu.memory_space<vmem>>, vector<1x16x32xf32>,
      %59 = arith.truncf %42 : vector<16x32xf32> to vector<16x32xbf16>
      %c0_32 = arith.constant 0 : index
      %c0_33 = arith.constant 0 : index
      %60 = vector.load %arg10[%c0_32, %c0_33] : memref<32x32xbf16, #tpu.memory_space<vmem>>, vector<32x32xbf16>
      %cst_34 = arith.constant dense<0.000000e+00> : vector<16x32xf32>
      %61 = tpu.matmul %59, %60, %cst_34 {dimension_numbers = #tpu.dot_dimension_numbers<[1], [0], [0], [1], [0, 0, 1, 1], [], []>} : vector<16x32xbf16>, vector<32x32xbf16>, vector<16x32xf32> -> vector<16x32xf32>
      %c0_35 = arith.constant 0 : index
      %c0_36 = arith.constant 0 : index
      %62 = vector.load %arg11[%c0_35, %c0_36] : memref<1x32xf32, #tpu.memory_space<vmem>>, vector<1x32xf32>
      %63 = vector.broadcast %62 : vector<1x32xf32> to vector<16x32xf32>
      %64 = arith.addf %61, %63 : vector<16x32xf32>
      %c0_37 = arith.constant 0 : index
      %c0_38 = arith.constant 0 : index
      %65 = vector.load %arg18[%c0_37, %c0_38] : memref<16x32xf32, #tpu.memory_space<vmem>>, vector<16x32xf32>
      %66 = arith.mulf %64, %65 : vector<16x32xf32>
      %67 = vector.extract_strided_slice %64 {offsets = [0, 16], sizes = [16, 16], strides = [1, 1]} : vector<16x32xf32> to vector<16x16xf32>
      %68 = vector.extract_strided_slice %64 {offsets = [0, 0], sizes = [16, 16], strides = [1, 1]} : vector<16x32xf32> to vector<16x16xf32>
      %69 = tpu.concatenate %67, %68 in 1 : vector<16x16xf32>, vector<16x16xf32> -> vector<16x32xf32>
      %c0_39 = arith.constant 0 : index
      %c0_40 = arith.constant 0 : index
      %70 = vector.load %arg17[%c0_39, %c0_40] : memref<16x32xf32, #tpu.memory_space<vmem>>, vector<16x32xf32>
      %71 = arith.mulf %69, %70 : vector<16x32xf32>
      %72 = arith.addf %66, %71 : vector<16x32xf32>
      %c0_41 = arith.constant 0 : index
      %c0_42 = arith.constant 0 : index
      %73 = vector.load %arg12[%c0_41, %c0_42] : memref<32x32xbf16, #tpu.memory_space<vmem>>, vector<32x32xbf16>
      %cst_43 = arith.constant dense<0.000000e+00> : vector<16x32xf32>
      %74 = tpu.matmul %16, %73, %cst_43 {dimension_numbers = #tpu.dot_dimension_numbers<[1], [0], [0], [1], [0, 0, 1, 1], [], []>} : vector<16x32xbf16>, vector<32x32xbf16>, vector<16x32xf32> -> vector<16x32xf32>
      %cst_44 = arith.constant 1.250000e-01 : f32
      %75 = vector.broadcast %cst_44 : f32 to vector<16x32xf32>
      %76 = arith.mulf %74, %75 : vector<16x32xf32>
      %cst_45 = arith.constant 1.250000e-01 : f32
      %77 = vector.broadcast %cst_45 : f32 to vector<16x32xf32>
      %78 = arith.mulf %72, %77 : vector<16x32xf32>
      %79 = tpu.concatenate %76, %78 in 1 : vector<16x32xf32>, vector<16x32xf32> -> vector<16x64xf32>
      %80 = arith.truncf %79 : vector<16x64xf32> to vector<16x64xbf16>
      %c0_46 = arith.constant 0 : index
      %c0_47 = arith.constant 0 : index
      %81 = vector.load %arg24[%c0_46, %c0_47] : memref<16x64xbf16, #tpu.memory_space<vmem>>, vector<16x64xbf16>
      tpu.vector_store %arg24[%c0_46, %c0_47], %80 {strides = array<i32>} : memref<16x64xbf16, #tpu.memory_space<vmem>>, vector<16x64xbf16>,
      %cst_48 = arith.constant -1.000000e+30 : f32
      %82 = vector.broadcast %cst_48 : f32 to vector<16x1xf32>
      %c0_49 = arith.constant 0 : index
      %c0_50 = arith.constant 0 : index
      %83 = vector.load %arg25[%c0_49, %c0_50] : memref<16x1xf32, #tpu.memory_space<vmem>>, vector<16x1xf32>
      tpu.vector_store %arg25[%c0_49, %c0_50], %82 {strides = array<i32>} : memref<16x1xf32, #tpu.memory_space<vmem>>, vector<16x1xf32>,
      %cst_51 = arith.constant 0.000000e+00 : f32
      %84 = vector.broadcast %cst_51 : f32 to vector<16x1xf32>
      %c0_52 = arith.constant 0 : index
      %c0_53 = arith.constant 0 : index
      %85 = vector.load %arg26[%c0_52, %c0_53] : memref<16x1xf32, #tpu.memory_space<vmem>>, vector<16x1xf32>
      tpu.vector_store %arg26[%c0_52, %c0_53], %84 {strides = array<i32>} : memref<16x1xf32, #tpu.memory_space<vmem>>, vector<16x1xf32>,
      %cst_54 = arith.constant 0.000000e+00 : f32
      %86 = vector.broadcast %cst_54 : f32 to vector<16x32xf32>
      %c0_55 = arith.constant 0 : index
      %c0_56 = arith.constant 0 : index
      %87 = vector.load %arg27[%c0_55, %c0_56] : memref<16x32xf32, #tpu.memory_space<vmem>>, vector<16x32xf32>
      tpu.vector_store %arg27[%c0_55, %c0_56], %86 {strides = array<i32>} : memref<16x32xf32, #tpu.memory_space<vmem>>, vector<16x32xf32>,
    } else {
    }
    %c16_i32 = arith.constant 16 : i32
    %4 = arith.muli %arg2, %c16_i32 : i32
    %c16_i32_1 = arith.constant 16 : i32
    %5 = arith.muli %arg1, %c16_i32_1 : i32
    %c15_i32 = arith.constant 15 : i32
    %6 = arith.addi %5, %c15_i32 : i32
    %7 = arith.addi %6, %0 : i32
    %8 = arith.cmpi sle, %4, %7 : i32
    %9 = arith.extui %8 : i1 to i32
    %c0_i32_2 = arith.constant 0 : i32
    %10 = arith.cmpi ne, %9, %c0_i32_2 : i32
    scf.if %10 {
      %c0_5 = arith.constant 0 : index
      %c0_6 = arith.constant 0 : index
      %c0_7 = arith.constant 0 : index
      %14 = vector.load %arg5[%c0_5, %c0_6, %c0_7] : memref<1x16x32xf32, #tpu.memory_space<vmem>>, vector<1x16x32xf32>
      %15 = vector.shape_cast %14 : vector<1x16x32xf32> to vector<16x32xf32>
      %16 = arith.truncf %15 : vector<16x32xf32> to vector<16x32xbf16>
      %c0_8 = arith.constant 0 : index
      %c0_9 = arith.constant 0 : index
      %17 = vector.load %arg6[%c0_8, %c0_9] : memref<32x32xbf16, #tpu.memory_space<vmem>>, vector<32x32xbf16>
      %cst = arith.constant dense<0.000000e+00> : vector<16x32xf32>
      %18 = tpu.matmul %16, %17, %cst {dimension_numbers = #tpu.dot_dimension_numbers<[1], [0], [0], [1], [0, 0, 1, 1], [], []>} : vector<16x32xbf16>, vector<32x32xbf16>, vector<16x32xf32> -> vector<16x32xf32>
      %cst_10 = arith.constant dense<0.000000e+00> : vector<16xf32>
      %19 = vector.multi_reduction <add>, %18, %cst_10 [1] : vector<16x32xf32> to vector<16xf32>
      %20 = vector.shape_cast %19 : vector<16xf32> to vector<16x1xf32>
      %cst_11 = arith.constant 3.200000e+01 : f32
      %21 = vector.broadcast %cst_11 : f32 to vector<16x1xf32>
      %22 = arith.divf %20, %21 : vector<16x1xf32>
      %23 = vector.broadcast %22 : vector<16x1xf32> to vector<16x32xf32>
      %24 = arith.subf %18, %23 : vector<16x32xf32>
      %25 = arith.mulf %24, %24 : vector<16x32xf32>
      %cst_12 = arith.constant dense<0.000000e+00> : vector<16xf32>
      %26 = vector.multi_reduction <add>, %25, %cst_12 [1] : vector<16x32xf32> to vector<16xf32>
      %27 = vector.shape_cast %26 : vector<16xf32> to vector<16x1xf32>
      %cst_13 = arith.constant 3.200000e+01 : f32
      %28 = vector.broadcast %cst_13 : f32 to vector<16x1xf32>
      %29 = arith.divf %27, %28 : vector<16x1xf32>
      %30 = vector.broadcast %22 : vector<16x1xf32> to vector<16x32xf32>
      %31 = arith.subf %18, %30 : vector<16x32xf32>
      %cst_14 = arith.constant 9.99999974E-6 : f32
      %32 = vector.broadcast %cst_14 : f32 to vector<16x1xf32>
      %33 = arith.addf %29, %32 : vector<16x1xf32>
      %34 = math.rsqrt %33 : vector<16x1xf32>
      %35 = vector.broadcast %34 : vector<16x1xf32> to vector<16x32xf32>
      %36 = arith.mulf %31, %35 : vector<16x32xf32>
      %c0_15 = arith.constant 0 : index
      %c0_16 = arith.constant 0 : index
      %37 = vector.load %arg7[%c0_15, %c0_16] : memref<1x32xf32, #tpu.memory_space<vmem>>, vector<1x32xf32>
      %38 = vector.broadcast %37 : vector<1x32xf32> to vector<16x32xf32>
      %39 = arith.mulf %36, %38 : vector<16x32xf32>
      %c0_17 = arith.constant 0 : index
      %c0_18 = arith.constant 0 : index
      %40 = vector.load %arg8[%c0_17, %c0_18] : memref<1x32xf32, #tpu.memory_space<vmem>>, vector<1x32xf32>
      %41 = vector.broadcast %40 : vector<1x32xf32> to vector<16x32xf32>
      %42 = arith.addf %39, %41 : vector<16x32xf32>
      %c0_19 = arith.constant 0 : index
      %c0_20 = arith.constant 0 : index
      %43 = vector.load %arg9[%c0_19, %c0_20] : memref<32x32xbf16, #tpu.memory_space<vmem>>, vector<32x32xbf16>
      %cst_21 = arith.constant dense<0.000000e+00> : vector<16x32xf32>
      %44 = tpu.matmul %16, %43, %cst_21 {dimension_numbers = #tpu.dot_dimension_numbers<[1], [0], [0], [1], [0, 0, 1, 1], [], []>} : vector<16x32xbf16>, vector<32x32xbf16>, vector<16x32xf32> -> vector<16x32xf32>
      %c0_22 = arith.constant 0 : index
      %c0_23 = arith.constant 0 : index
      %45 = vector.load %arg20[%c0_22, %c0_23] : memref<16x32xf32, #tpu.memory_space<vmem>>, vector<16x32xf32>
      %46 = arith.mulf %44, %45 : vector<16x32xf32>
      %47 = vector.extract_strided_slice %44 {offsets = [0, 16], sizes = [16, 16], strides = [1, 1]} : vector<16x32xf32> to vector<16x16xf32>
      %48 = vector.extract_strided_slice %44 {offsets = [0, 0], sizes = [16, 16], strides = [1, 1]} : vector<16x32xf32> to vector<16x16xf32>
      %49 = tpu.concatenate %47, %48 in 1 : vector<16x16xf32>, vector<16x16xf32> -> vector<16x32xf32>
      %c0_24 = arith.constant 0 : index
      %c0_25 = arith.constant 0 : index
      %50 = vector.load %arg19[%c0_24, %c0_25] : memref<16x32xf32, #tpu.memory_space<vmem>>, vector<16x32xf32>
      %51 = arith.mulf %49, %50 : vector<16x32xf32>
      %52 = arith.addf %46, %51 : vector<16x32xf32>
      %53 = tpu.concatenate %42, %52 in 1 : vector<16x32xf32>, vector<16x32xf32> -> vector<16x64xf32>
      %54 = arith.truncf %53 : vector<16x64xf32> to vector<16x64xbf16>
      %c0_26 = arith.constant 0 : index
      %c0_27 = arith.constant 0 : index
      %55 = vector.load %arg24[%c0_26, %c0_27] : memref<16x64xbf16, #tpu.memory_space<vmem>>, vector<16x64xbf16>
      %cst_28 = arith.constant dense<0.000000e+00> : vector<16x16xf32>
      %56 = tpu.matmul %55, %54, %cst_28 {dimension_numbers = #tpu.dot_dimension_numbers<[1], [1], [0], [0], [0, 0, 1, 0], [], []>} : vector<16x64xbf16>, vector<16x64xbf16>, vector<16x16xf32> -> vector<16x16xf32>
      %c16_i32_29 = arith.constant 16 : i32
      %57 = arith.muli %arg1, %c16_i32_29 : i32
      %58 = tpu.iota {dimensions = array<i32: 0>} : vector<16x16xi32>
      %59 = vector.broadcast %57 : i32 to vector<16x16xi32>
      %60 = arith.addi %59, %58 : vector<16x16xi32>
      %61 = tpu.iota {dimensions = array<i32: 1>} : vector<16x16xi32>
      %62 = vector.broadcast %4 : i32 to vector<16x16xi32>
      %63 = arith.addi %62, %61 : vector<16x16xi32>
      %64 = vector.broadcast %0 : i32 to vector<16x16xi32>
      %65 = arith.addi %60, %64 : vector<16x16xi32>
      %66 = arith.cmpi sle, %63, %65 : vector<16x16xi32>
      %cst_30 = arith.constant -1.000000e+30 : f32
      %67 = vector.broadcast %cst_30 : f32 to vector<16x16xf32>
      %68 = arith.select %66, %56, %67 : vector<16x16xi1>, vector<16x16xf32>
      %c0_31 = arith.constant 0 : index
      %c0_32 = arith.constant 0 : index
      %69 = vector.load %arg25[%c0_31, %c0_32] : memref<16x1xf32, #tpu.memory_space<vmem>>, vector<16x1xf32>
      %cst_33 = arith.constant dense<0xFF800000> : vector<16xf32>
      %70 = vector.multi_reduction <maximumf>, %68, %cst_33 [1] : vector<16x16xf32> to vector<16xf32>
      %71 = vector.shape_cast %70 : vector<16xf32> to vector<16x1xf32>
      %72 = arith.maximumf %69, %71 : vector<16x1xf32>
      %73 = arith.subf %69, %72 : vector<16x1xf32>
      %74 = math.exp %73 : vector<16x1xf32>
      %75 = vector.broadcast %72 : vector<16x1xf32> to vector<16x16xf32>
      %76 = arith.subf %68, %75 : vector<16x16xf32>
      %77 = math.exp %76 : vector<16x16xf32>
      %c0_34 = arith.constant 0 : index
      %c0_35 = arith.constant 0 : index
      %78 = vector.load %arg26[%c0_34, %c0_35] : memref<16x1xf32, #tpu.memory_space<vmem>>, vector<16x1xf32>
      %79 = arith.mulf %74, %78 : vector<16x1xf32>
      %cst_36 = arith.constant dense<0.000000e+00> : vector<16xf32>
      %80 = vector.multi_reduction <add>, %77, %cst_36 [1] : vector<16x16xf32> to vector<16xf32>
      %81 = vector.shape_cast %80 : vector<16xf32> to vector<16x1xf32>
      %82 = arith.addf %79, %81 : vector<16x1xf32>
      %c0_37 = arith.constant 0 : index
      %c0_38 = arith.constant 0 : index
      %83 = vector.load %arg26[%c0_37, %c0_38] : memref<16x1xf32, #tpu.memory_space<vmem>>, vector<16x1xf32>
      tpu.vector_store %arg26[%c0_37, %c0_38], %82 {strides = array<i32>} : memref<16x1xf32, #tpu.memory_space<vmem>>, vector<16x1xf32>,
      %84 = arith.truncf %42 : vector<16x32xf32> to vector<16x32xbf16>
      %c0_39 = arith.constant 0 : index
      %c0_40 = arith.constant 0 : index
      %85 = vector.load %arg13[%c0_39, %c0_40] : memref<32x32xbf16, #tpu.memory_space<vmem>>, vector<32x32xbf16>
      %cst_41 = arith.constant dense<0.000000e+00> : vector<16x32xf32>
      %86 = tpu.matmul %84, %85, %cst_41 {dimension_numbers = #tpu.dot_dimension_numbers<[1], [0], [0], [1], [0, 0, 1, 1], [], []>} : vector<16x32xbf16>, vector<32x32xbf16>, vector<16x32xf32> -> vector<16x32xf32>
      %c0_42 = arith.constant 0 : index
      %c0_43 = arith.constant 0 : index
      %87 = vector.load %arg27[%c0_42, %c0_43] : memref<16x32xf32, #tpu.memory_space<vmem>>, vector<16x32xf32>
      %88 = vector.broadcast %74 : vector<16x1xf32> to vector<16x32xf32>
      %89 = arith.mulf %88, %87 : vector<16x32xf32>
      %90 = arith.truncf %77 : vector<16x16xf32> to vector<16x16xbf16>
      %91 = arith.truncf %86 : vector<16x32xf32> to vector<16x32xbf16>
      %cst_44 = arith.constant dense<0.000000e+00> : vector<16x32xf32>
      %92 = tpu.matmul %90, %91, %cst_44 {dimension_numbers = #tpu.dot_dimension_numbers<[1], [0], [0], [1], [0, 0, 1, 1], [], []>} : vector<16x16xbf16>, vector<16x32xbf16>, vector<16x32xf32> -> vector<16x32xf32>
      %93 = arith.addf %89, %92 : vector<16x32xf32>
      %c0_45 = arith.constant 0 : index
      %c0_46 = arith.constant 0 : index
      %94 = vector.load %arg27[%c0_45, %c0_46] : memref<16x32xf32, #tpu.memory_space<vmem>>, vector<16x32xf32>
      tpu.vector_store %arg27[%c0_45, %c0_46], %93 {strides = array<i32>} : memref<16x32xf32, #tpu.memory_space<vmem>>, vector<16x32xf32>,
      %c0_47 = arith.constant 0 : index
      %c0_48 = arith.constant 0 : index
      %95 = vector.load %arg25[%c0_47, %c0_48] : memref<16x1xf32, #tpu.memory_space<vmem>>, vector<16x1xf32>
      tpu.vector_store %arg25[%c0_47, %c0_48], %72 {strides = array<i32>} : memref<16x1xf32, #tpu.memory_space<vmem>>, vector<16x1xf32>,
    } else {
    }
    %c0_i32_3 = arith.constant 0 : i32
    %11 = arith.cmpi eq, %arg2, %c0_i32_3 : i32
    %12 = arith.extui %11 : i1 to i32
    %c0_i32_4 = arith.constant 0 : i32
    %13 = arith.cmpi ne, %12, %c0_i32_4 : i32
    scf.if %13 {
      %c0_5 = arith.constant 0 : index
      %c0_6 = arith.constant 0 : index
      %14 = vector.load %arg26[%c0_5, %c0_6] : memref<16x1xf32, #tpu.memory_space<vmem>>, vector<16x1xf32>
      %15 = tpu.reciprocal %14 {approx = true} : vector<16x1xf32> -> vector<16x1xf32>
      %c0_7 = arith.constant 0 : index
      %c0_8 = arith.constant 0 : index
      %16 = vector.load %arg27[%c0_7, %c0_8] : memref<16x32xf32, #tpu.memory_space<vmem>>, vector<16x32xf32>
      %17 = vector.broadcast %15 : vector<16x1xf32> to vector<16x32xf32>
      %18 = arith.mulf %16, %17 : vector<16x32xf32>
      %19 = arith.truncf %18 : vector<16x32xf32> to vector<16x32xbf16>
      %c0_9 = arith.constant 0 : index
      %c0_10 = arith.constant 0 : index
      %20 = vector.load %arg14[%c0_9, %c0_10] : memref<32x32xbf16, #tpu.memory_space<vmem>>, vector<32x32xbf16>
      %cst = arith.constant dense<0.000000e+00> : vector<16x32xf32>
      %21 = tpu.matmul %19, %20, %cst {dimension_numbers = #tpu.dot_dimension_numbers<[1], [0], [0], [1], [0, 0, 1, 1], [], []>} : vector<16x32xbf16>, vector<32x32xbf16>, vector<16x32xf32> -> vector<16x32xf32>
      %c0_11 = arith.constant 0 : index
      %c0_12 = arith.constant 0 : index
      %c0_13 = arith.constant 0 : index
      %22 = vector.load %arg21[%c0_11, %c0_12, %c0_13] : memref<1x16x32xf32, #tpu.memory_space<vmem>>, vector<1x16x32xf32>
      %23 = vector.shape_cast %22 : vector<1x16x32xf32> to vector<16x32xf32>
      %24 = vector.shape_cast %21 : vector<16x32xf32> to vector<1x16x32xf32>
      tpu.vector_store %arg21[%c0_11, %c0_12, %c0_13], %24 {strides = array<i32>} : memref<1x16x32xf32, #tpu.memory_space<vmem>>, vector<1x16x32xf32>,
    } else {
    }
    return
  }
  func.func @transform_0(%arg0: i32, %arg1: i32, %arg2: i32, %arg3: memref<1xi32, #tpu.memory_space<smem>>) -> (i32, i32, i32) {
    %c0_i32 = arith.constant 0 : i32
    %c0_i32_0 = arith.constant 0 : i32
    return %arg0, %arg1, %c0_i32 : i32, i32, i32
  }
  func.func @transform_1(%arg0: i32, %arg1: i32, %arg2: i32, %arg3: memref<1xi32, #tpu.memory_space<smem>>) -> (i32, i32, i32) {
    %c0_i32 = arith.constant 0 : i32
    %c0_i32_0 = arith.constant 0 : i32
    return %arg0, %arg2, %c0_i32 : i32, i32, i32
  }
  func.func @transform_2(%arg0: i32, %arg1: i32, %arg2: i32, %arg3: memref<1xi32, #tpu.memory_space<smem>>) -> (i32, i32) {
    %c0_i32 = arith.constant 0 : i32
    %c0_i32_0 = arith.constant 0 : i32
    %c0_i32_1 = arith.constant 0 : i32
    return %c0_i32, %c0_i32_0 : i32, i32
  }
  func.func @transform_3(%arg0: i32, %arg1: i32, %arg2: i32, %arg3: memref<1xi32, #tpu.memory_space<smem>>) -> (i32, i32) {
    %c0_i32 = arith.constant 0 : i32
    %c0_i32_0 = arith.constant 0 : i32
    %c0_i32_1 = arith.constant 0 : i32
    return %c0_i32, %c0_i32_0 : i32, i32
  }
  func.func @transform_4(%arg0: i32, %arg1: i32, %arg2: i32, %arg3: memref<1xi32, #tpu.memory_space<smem>>) -> (i32, i32) {
    %c0_i32 = arith.constant 0 : i32
    %c0_i32_0 = arith.constant 0 : i32
    %c0_i32_1 = arith.constant 0 : i32
    return %c0_i32, %c0_i32_0 : i32, i32
  }
  func.func @transform_5(%arg0: i32, %arg1: i32, %arg2: i32, %arg3: memref<1xi32, #tpu.memory_space<smem>>) -> (i32, i32) {
    %c0_i32 = arith.constant 0 : i32
    %c0_i32_0 = arith.constant 0 : i32
    %c0_i32_1 = arith.constant 0 : i32
    return %c0_i32, %c0_i32_0 : i32, i32
  }
  func.func @transform_6(%arg0: i32, %arg1: i32, %arg2: i32, %arg3: memref<1xi32, #tpu.memory_space<smem>>) -> (i32, i32) {
    %c0_i32 = arith.constant 0 : i32
    %c0_i32_0 = arith.constant 0 : i32
    %c0_i32_1 = arith.constant 0 : i32
    return %c0_i32, %c0_i32_0 : i32, i32
  }
  func.func @transform_7(%arg0: i32, %arg1: i32, %arg2: i32, %arg3: memref<1xi32, #tpu.memory_space<smem>>) -> (i32, i32) {
    %c0_i32 = arith.constant 0 : i32
    %c0_i32_0 = arith.constant 0 : i32
    %c0_i32_1 = arith.constant 0 : i32
    return %c0_i32, %c0_i32_0 : i32, i32
  }
  func.func @transform_8(%arg0: i32, %arg1: i32, %arg2: i32, %arg3: memref<1xi32, #tpu.memory_space<smem>>) -> (i32, i32) {
    %c0_i32 = arith.constant 0 : i32
    %c0_i32_0 = arith.constant 0 : i32
    %c0_i32_1 = arith.constant 0 : i32
    return %c0_i32, %c0_i32_0 : i32, i32
  }
  func.func @transform_9(%arg0: i32, %arg1: i32, %arg2: i32, %arg3: memref<1xi32, #tpu.memory_space<smem>>) -> (i32, i32) {
    %c0_i32 = arith.constant 0 : i32
    %c0_i32_0 = arith.constant 0 : i32
    %c0_i32_1 = arith.constant 0 : i32
    return %c0_i32, %c0_i32_0 : i32, i32
  }
  func.func @transform_10(%arg0: i32, %arg1: i32, %arg2: i32, %arg3: memref<1xi32, #tpu.memory_space<smem>>) -> (i32, i32) {
    %c0_i32 = arith.constant 0 : i32
    %c0_i32_0 = arith.constant 0 : i32
    %c0_i32_1 = arith.constant 0 : i32
    return %c0_i32, %c0_i32_0 : i32, i32
  }
  func.func @transform_11(%arg0: i32, %arg1: i32, %arg2: i32, %arg3: memref<1xi32, #tpu.memory_space<smem>>) -> (i32, i32) {
    %c0_i32 = arith.constant 0 : i32
    %c0_i32_0 = arith.constant 0 : i32
    return %arg1, %c0_i32 : i32, i32
  }
  func.func @transform_12(%arg0: i32, %arg1: i32, %arg2: i32, %arg3: memref<1xi32, #tpu.memory_space<smem>>) -> (i32, i32) {
    %c0_i32 = arith.constant 0 : i32
    %c0_i32_0 = arith.constant 0 : i32
    return %arg1, %c0_i32 : i32, i32
  }
  func.func @transform_13(%arg0: i32, %arg1: i32, %arg2: i32, %arg3: memref<1xi32, #tpu.memory_space<smem>>) -> (i32, i32) {
    %c0_i32 = arith.constant 0 : i32
    %c0_i32_0 = arith.constant 0 : i32
    return %arg1, %c0_i32 : i32, i32
  }
  func.func @transform_14(%arg0: i32, %arg1: i32, %arg2: i32, %arg3: memref<1xi32, #tpu.memory_space<smem>>) -> (i32, i32) {
    %c0_i32 = arith.constant 0 : i32
    %c0_i32_0 = arith.constant 0 : i32
    return %arg1, %c0_i32 : i32, i32
  }
  func.func @transform_15(%arg0: i32, %arg1: i32, %arg2: i32, %arg3: memref<1xi32, #tpu.memory_space<smem>>) -> (i32, i32) {
    %c0_i32 = arith.constant 0 : i32
    %c0_i32_0 = arith.constant 0 : i32
    return %arg2, %c0_i32 : i32, i32
  }
  func.func @transform_16(%arg0: i32, %arg1: i32, %arg2: i32, %arg3: memref<1xi32, #tpu.memory_space<smem>>) -> (i32, i32) {
    %c0_i32 = arith.constant 0 : i32
    %c0_i32_0 = arith.constant 0 : i32
    return %arg2, %c0_i32 : i32, i32
  }
  func.func @transform_17(%arg0: i32, %arg1: i32, %arg2: i32, %arg3: memref<1xi32, #tpu.memory_space<smem>>) -> (i32, i32, i32) {
    %c0_i32 = arith.constant 0 : i32
    %c0_i32_0 = arith.constant 0 : i32
    return %arg0, %arg1, %c0_i32 : i32, i32, i32
  }
  func.func @transform_18(%arg0: i32, %arg1: i32, %arg2: i32, %arg3: memref<1xi32, #tpu.memory_space<smem>>) -> (i32, i32, i32) {
    %c0_i32 = arith.constant 0 : i32
    %c0_i32_0 = arith.constant 0 : i32
    return %arg0, %arg1, %c0_i32 : i32, i32, i32
  }
  func.func @transform_19(%arg0: i32, %arg1: i32, %arg2: i32, %arg3: memref<1xi32, #tpu.memory_space<smem>>) -> (i32, i32, i32) {
    %c0_i32 = arith.constant 0 : i32
    %c0_i32_0 = arith.constant 0 : i32
    return %arg0, %arg1, %c0_i32 : i32, i32, i32
  }
}

</mosaic_0001>

<llo_original>
// kernel: tpu_custom_call.1
$region0: #{tpu_custom_call.1}
  #allocation0 [shape = 'u32[]', space=smem, size = 0x4, offset = 0x4, fixed_abs, tag = 'smem constant byte address 0x4 - core index']
  #allocation1 [shape = 'u32[144,128]{1,0:T(1,128)}', space=vmem, size = 0x12000, scoped, tag = 'internal scratch']
  #allocation2 [shape = 'bf16[16,64]{1,0:T(8,128)(2,1)}', space=vmem, size = 0x1000, scoped, tag = 'scratch operand']
  #allocation3 [shape = 'f32[16,1]{1,0:T(8,128)}', space=vmem, size = 0x2000, scoped, tag = 'scratch operand']
  #allocation4 [shape = 'f32[16,1]{1,0:T(8,128)}', space=vmem, size = 0x2000, scoped, tag = 'scratch operand']
  #allocation5 [shape = 'f32[16,32]{1,0:T(8,128)}', space=vmem, size = 0x2000, scoped, tag = 'scratch operand']
  #allocation6 [shape = 's32[1]{0}', space=sflag, size = 0x4, scoped, tag = 'scoped memory for tpu_custom_call.1']
  #allocation7 [shape = 's32[1]{0:T(128)S(6)}', space=smem, size = 0x200, scoped, tag = 'prefetched SMEM operand 0']
  %s0 = inlined_call_operand.<no memory space> [shape: s32[1], index: 0, kind: input, shape index: {}]
  %s1 = inlined_call_operand.hbm [shape: f32[2,16,32], index: 1, kind: input, shape index: {}]
  %s2 = inlined_call_operand.hbm [shape: f32[2,16,32], index: 2, kind: input, shape index: {}]
  %s3 = inlined_call_operand.hbm [shape: bf16[32,32], index: 3, kind: input, shape index: {}]
  %s4 = inlined_call_operand.hbm [shape: f32[1,32], index: 4, kind: input, shape index: {}]
  %s5 = inlined_call_operand.hbm [shape: f32[1,32], index: 5, kind: input, shape index: {}]
  %s6 = inlined_call_operand.hbm [shape: bf16[32,32], index: 6, kind: input, shape index: {}]
  %s7 = inlined_call_operand.hbm [shape: bf16[32,32], index: 7, kind: input, shape index: {}]
  %s8 = inlined_call_operand.hbm [shape: f32[1,32], index: 8, kind: input, shape index: {}]
  %s9 = inlined_call_operand.vmem [shape: bf16[32,32], index: 9, kind: input, shape index: {}]
  %s10 = inlined_call_operand.hbm [shape: bf16[32,32], index: 10, kind: input, shape index: {}]
  %s11 = inlined_call_operand.hbm [shape: bf16[32,32], index: 11, kind: input, shape index: {}]
  %s12 = inlined_call_operand.hbm [shape: f32[16,32], index: 12, kind: input, shape index: {}]
  %s13 = inlined_call_operand.hbm [shape: f32[16,32], index: 13, kind: input, shape index: {}]
  %s14 = inlined_call_operand.hbm [shape: f32[16,32], index: 14, kind: input, shape index: {}]
  %s15 = inlined_call_operand.hbm [shape: f32[16,32], index: 15, kind: input, shape index: {}]
  %s16 = inlined_call_operand.hbm [shape: f32[16,32], index: 16, kind: input, shape index: {}]
  %s17 = inlined_call_operand.hbm [shape: f32[16,32], index: 17, kind: input, shape index: {}]
  %s18 = inlined_call_operand.hbm [shape: f32[2,16,32], index: 18, kind: output, shape index: {0}]
  %s19 = inlined_call_operand.hbm [shape: f32[2,16,32], index: 19, kind: output, shape index: {1}]
  %s20 = inlined_call_operand.hbm [shape: f32[2,16,32], index: 20, kind: output, shape index: {2}]
  %21 = xla_tuple %s18, %s19, %s20
  %s22 = sld [smem:[#allocation0]]
  $region193: #{tpu_custom_call.1} parent=0
    _
  %s24 = ssub.s32 1, %s22
  %s25 = scalar_select 0, %s24, %s22
  %26 = sst [smem:[#allocation7]] %s0
  $region1: #{tpu_custom_call.1} parent=0
    #allocation8 [shape = 'u8[16384]{0}', space=vmem, size = 0x4000, scoped, tag = 'input window, operand 1']
    #allocation9 [shape = 's32[2]{0}', space=sflag, size = 0x8, scoped, tag = 'scoped memory for tpu_custom_call.1']
    #allocation10 [shape = 's32[2]{0}', space=sflag, size = 0x8, scoped, tag = 'scoped memory for tpu_custom_call.1']
    #allocation11 [shape = 'u8[16384]{0}', space=vmem, size = 0x4000, scoped, tag = 'input window, operand 2']
    #allocation12 [shape = 's32[2]{0}', space=sflag, size = 0x8, scoped, tag = 'scoped memory for tpu_custom_call.1']
    #allocation13 [shape = 'u8[8192]{0}', space=vmem, size = 0x2000, scoped, tag = 'input window, operand 3, single buffered']
    #allocation14 [shape = 'u8[512]{0}', space=vmem, size = 0x400, scoped, tag = 'input window, operand 4, single buffered']
    #allocation15 [shape = 's32[1]{0}', space=sflag, size = 0x4, scoped, tag = 'scoped memory for tpu_custom_call.1']
    #allocation16 [shape = 'u8[512]{0}', space=vmem, size = 0x400, scoped, tag = 'input window, operand 5, single buffered']
    #allocation17 [shape = 'u8[8192]{0}', space=vmem, size = 0x2000, scoped, tag = 'input window, operand 6, single buffered']
    #allocation18 [shape = 's32[1]{0}', space=sflag, size = 0x4, scoped, tag = 'scoped memory for tpu_custom_call.1']
    #allocation19 [shape = 'u8[8192]{0}', space=vmem, size = 0x2000, scoped, tag = 'input window, operand 7, single buffered']
    #allocation20 [shape = 'u8[512]{0}', space=vmem, size = 0x400, scoped, tag = 'input window, operand 8, single buffered']
    #allocation21 [shape = 's32[1]{0}', space=sflag, size = 0x4, scoped, tag = 'scoped memory for tpu_custom_call.1']
    #allocation22 [shape = 'u8[8192]{0}', space=vmem, size = 0x2000, scoped, tag = 'input window, operand 10, single buffered']
    #allocation23 [shape = 'u8[8192]{0}', space=vmem, size = 0x2000, scoped, tag = 'input window, operand 11, single buffered']
    #allocation24 [shape = 's32[1]{0}', space=sflag, size = 0x4, scoped, tag = 'scoped memory for tpu_custom_call.1']
    #allocation25 [shape = 'u8[8192]{0}', space=vmem, size = 0x2000, scoped, tag = 'input window, operand 12, single buffered']
    #allocation26 [shape = 'u8[8192]{0}', space=vmem, size = 0x2000, scoped, tag = 'input window, operand 13, single buffered']
    #allocation27 [shape = 's32[1]{0}', space=sflag, size = 0x4, scoped, tag = 'scoped memory for tpu_custom_call.1']
    #allocation28 [shape = 'u8[8192]{0}', space=vmem, size = 0x2000, scoped, tag = 'input window, operand 14, single buffered']
    #allocation29 [shape = 'u8[8192]{0}', space=vmem, size = 0x2000, scoped, tag = 'input window, operand 15, single buffered']
    #allocation30 [shape = 's32[1]{0}', space=sflag, size = 0x4, scoped, tag = 'scoped memory for tpu_custom_call.1']
    #allocation31 [shape = 'u8[8192]{0}', space=vmem, size = 0x2000, scoped, tag = 'input window, operand 16, single buffered']
    #allocation32 [shape = 'u8[8192]{0}', space=vmem, size = 0x2000, scoped, tag = 'input window, operand 17, single buffered']
    #allocation33 [shape = 's32[1]{0}', space=sflag, size = 0x4, scoped, tag = 'scoped memory for tpu_custom_call.1']
    #allocation34 [shape = 'u8[16384]{0}', space=vmem, size = 0x4000, scoped, tag = 'output window, operand 0']
    #allocation35 [shape = 'u8[16384]{0}', space=vmem, size = 0x4000, scoped, tag = 'output window, operand 1']
    #allocation36 [shape = 's32[2]{0}', space=sflag, size = 0x8, scoped, tag = 'scoped memory for tpu_custom_call.1']
    #allocation37 [shape = 'u8[16384]{0}', space=vmem, size = 0x4000, scoped, tag = 'output window, operand 2']
    %27 = vsyncpa [#allocation9], 0
    %s28 = scalar_lea.sflag [#allocation9], 1
    %29 = vsyncpa %s28, 0
    %30 = vsyncpa [#allocation12], 0
    %s31 = scalar_lea.sflag [#allocation12], 1
    %32 = vsyncpa %s31, 0
    %33 = vsyncpa [#allocation15], 0
    %34 = vsyncpa [#allocation18], 0
    %35 = vsyncpa [#allocation21], 0
    %36 = vsyncpa [#allocation24], 0
    %37 = vsyncpa [#allocation27], 0
    %38 = vsyncpa [#allocation30], 0
    %39 = vsyncpa [#allocation33], 0
    %40 = vsyncpa [#allocation10], 0
    %s41 = scalar_lea.sflag [#allocation10], 1
    %42 = vsyncpa %s41, 0
    %43 = vsyncpa [#allocation36], 0
    %s44 = scalar_lea.sflag [#allocation36], 1
    %45 = vsyncpa %s44, 0
    loop: start=0, step=1, limit=4
    $region2: #{tpu_custom_call.1} parent=1 // loop_pre_header
      _
    $region3: #{tpu_custom_call.1} parent=1 // loop_header
      %s47 = sphi 0, %s51
      %p48 = scmp.ge.s32.totalorder %s47, 4
      %s54 = sphi 0, %s73
      %s55 = sphi 0, %s69
      %s56 = sphi 0, %s65
      %s57 = sphi 0, %s54
      %s58 = sphi 0, %s55
      %s59 = sphi 0, %s56
      %s60 = sphi 0, %s57
      %s61 = sphi 0, %s58
      %s62 = sphi 0, %s59
      %s78 = sphi 0, %s80
      %s81 = sphi 0, %s78
      %s82 = sphi 0, %s81
      %s98 = sphi 0, %s82
      %s106 = sphi 0, %s108
      %s109 = sphi 0, %s106
      %s110 = sphi 0, %s109
      %s126 = sphi 0, %s110
      %s130 = sphi 0, %s130
      %s132 = sphi 0, %s130
      %s133 = sphi 0, %s132
      %s147 = sphi 0, %s133
      %s151 = sphi 0, %s151
      %s153 = sphi 0, %s151
      %s154 = sphi 0, %s153
      %s168 = sphi 0, %s154
      %s172 = sphi 0, %s172
      %s174 = sphi 0, %s172
      %s175 = sphi 0, %s174
      %s189 = sphi 0, %s175
      %s193 = sphi 0, %s193
      %s195 = sphi 0, %s193
      %s196 = sphi 0, %s195
      %s210 = sphi 0, %s196
      %s214 = sphi 0, %s214
      %s216 = sphi 0, %s214
      %s217 = sphi 0, %s216
      %s231 = sphi 0, %s217
      %s235 = sphi 0, %s235
      %s237 = sphi 0, %s235
      %s238 = sphi 0, %s237
      %s252 = sphi 0, %s238
      %s256 = sphi 0, %s256
      %s258 = sphi 0, %s256
      %s259 = sphi 0, %s258
      %s273 = sphi 0, %s259
      %s277 = sphi 0, %s277
      %s279 = sphi 0, %s277
      %s280 = sphi 0, %s279
      %s294 = sphi 0, %s280
      %s298 = sphi 0, %s298
      %s300 = sphi 0, %s298
      %s301 = sphi 0, %s300
      %s315 = sphi 0, %s301
      %s321 = sphi 0, %s323
      %s324 = sphi 0, %s321
      %s325 = sphi 0, %s324
      %s341 = sphi 0, %s325
      %s347 = sphi 0, %s349
      %s350 = sphi 0, %s347
      %s351 = sphi 0, %s350
      %s367 = sphi 0, %s351
      %s373 = sphi 0, %s375
      %s376 = sphi 0, %s373
      %s377 = sphi 0, %s376
      %s393 = sphi 0, %s377
      %s399 = sphi 0, %s401
      %s402 = sphi 0, %s399
      %s403 = sphi 0, %s402
      %s419 = sphi 0, %s403
      %s425 = sphi 0, %s427
      %s428 = sphi 0, %s425
      %s429 = sphi 0, %s428
      %s445 = sphi 0, %s429
      %s451 = sphi 0, %s453
      %s454 = sphi 0, %s451
      %s455 = sphi 0, %s454
      %s471 = sphi 0, %s455
      %s479 = sphi 0, %s481
      %s482 = sphi 0, %s479
      %s483 = sphi 0, %s482
      %s499 = sphi 0, %s483
      %s507 = sphi 0, %s509
      %s510 = sphi 0, %s507
      %s511 = sphi 0, %s510
      %s527 = sphi 0, %s511
      %s535 = sphi 0, %s537
      %s538 = sphi 0, %s535
      %s539 = sphi 0, %s538
      %s555 = sphi 0, %s539
    $region4: #{tpu_custom_call.1} parent=1 // loop_header_branch
      %50 = sbr.rel (%p48) target = $region8
    $region5: #{tpu_custom_call.1} parent=1 // loop_body
      %s52 = ssub.s32 %s47, 1
      %s53 = ssub.s32 %s47, 2
      %s63 = sadd.s32 1, %s56
      %p64 = scmp.ge.s32.totalorder %s63, 1
      %s65 = scalar_select %p64, 0, %s63
      %s66 = sadd.s32 1, %s55
      %s67 = scalar_select %p64, %s66, %s55
      %p68 = scmp.ge.s32.totalorder %s67, 1
      %s69 = scalar_select %p68, 0, %s67
      %s70 = sadd.s32 1, %s54
      %s71 = scalar_select %p68, %s70, %s54
      %p72 = scmp.ge.s32.totalorder %s71, 2
      %s73 = scalar_select %p72, 0, %s71
      %s74 = ssub.s32 %s54, %s73
      %s75 = ssub.s32 %s55, %s69
      %s76 = sor.u32 %s74, %s75
      %p77 = scmp.eq.s32.totalorder %s76, 0
      %s79 = sadd.s32 %s78, 1
      %s80 = scalar_select %p77, %s78, %s79
      %p83 = pneg %p77
      %p84 = scmp.eq.s32.totalorder %s47, 1
      %p85 = por %p83, %p84
      %p86 = scmp.ne.s32.totalorder %s78, %s81
      %p87 = scmp.eq.s32.totalorder %s47, 0
      %p88 = por %p86, %p87
      %p89 = scmp.ne.s32.totalorder %s78, %s81
      %p90 = scmp.eq.s32.totalorder %s52, 1
      %p91 = por %p89, %p90
      %p92 = scmp.ne.s32.totalorder %s81, %s82
      %p93 = scmp.eq.s32.totalorder %s52, 0
      %p94 = por %p92, %p93
      %p95 = scmp.ne.s32.totalorder %s81, %s82
      %p96 = scmp.eq.s32.totalorder %s53, 1
      %p97 = por %p95, %p96
      %p99 = scmp.ne.s32.totalorder %s82, %s98
      %p100 = scmp.eq.s32.totalorder %s53, 0
      %p101 = por %p99, %p100
      %s102 = ssub.s32 %s54, %s73
      %s103 = ssub.s32 %s56, %s65
      %s104 = sor.u32 %s102, %s103
      %p105 = scmp.eq.s32.totalorder %s104, 0
      %s107 = sadd.s32 %s106, 1
      %s108 = scalar_select %p105, %s106, %s107
      %p111 = pneg %p105
      %p112 = scmp.eq.s32.totalorder %s47, 1
      %p113 = por %p111, %p112
      %p114 = scmp.ne.s32.totalorder %s106, %s109
      %p115 = scmp.eq.s32.totalorder %s47, 0
      %p116 = por %p114, %p115
      %p117 = scmp.ne.s32.totalorder %s106, %s109
      %p118 = scmp.eq.s32.totalorder %s52, 1
      %p119 = por %p117, %p118
      %p120 = scmp.ne.s32.totalorder %s109, %s110
      %p121 = scmp.eq.s32.totalorder %s52, 0
      %p122 = por %p120, %p121
      %p123 = scmp.ne.s32.totalorder %s109, %s110
      %p124 = scmp.eq.s32.totalorder %s53, 1
      %p125 = por %p123, %p124
      %p127 = scmp.ne.s32.totalorder %s110, %s126
      %p128 = scmp.eq.s32.totalorder %s53, 0
      %p129 = por %p127, %p128
      %s131 = sadd.s32 %s130, 1
      %p134 = scmp.eq.s32.totalorder %s47, 1
      %p135 = scmp.ne.s32.totalorder %s130, %s132
      %p136 = scmp.eq.s32.totalorder %s47, 0
      %p137 = por %p135, %p136
      %p138 = scmp.ne.s32.totalorder %s130, %s132
      %p139 = scmp.eq.s32.totalorder %s52, 1
      %p140 = por %p138, %p139
      %p141 = scmp.ne.s32.totalorder %s132, %s133
      %p142 = scmp.eq.s32.totalorder %s52, 0
      %p143 = por %p141, %p142
      %p144 = scmp.ne.s32.totalorder %s132, %s133
      %p145 = scmp.eq.s32.totalorder %s53, 1
      %p146 = por %p144, %p145
      %p148 = scmp.ne.s32.totalorder %s133, %s147
      %p149 = scmp.eq.s32.totalorder %s53, 0
      %p150 = por %p148, %p149
      %s152 = sadd.s32 %s151, 1
      %p155 = scmp.eq.s32.totalorder %s47, 1
      %p156 = scmp.ne.s32.totalorder %s151, %s153
      %p157 = scmp.eq.s32.totalorder %s47, 0
      %p158 = por %p156, %p157
      %p159 = scmp.ne.s32.totalorder %s151, %s153
      %p160 = scmp.eq.s32.totalorder %s52, 1
      %p161 = por %p159, %p160
      %p162 = scmp.ne.s32.totalorder %s153, %s154
      %p163 = scmp.eq.s32.totalorder %s52, 0
      %p164 = por %p162, %p163
      %p165 = scmp.ne.s32.totalorder %s153, %s154
      %p166 = scmp.eq.s32.totalorder %s53, 1
      %p167 = por %p165, %p166
      %p169 = scmp.ne.s32.totalorder %s154, %s168
      %p170 = scmp.eq.s32.totalorder %s53, 0
      %p171 = por %p169, %p170
      %s173 = sadd.s32 %s172, 1
      %p176 = scmp.eq.s32.totalorder %s47, 1
      %p177 = scmp.ne.s32.totalorder %s172, %s174
      %p178 = scmp.eq.s32.totalorder %s47, 0
      %p179 = por %p177, %p178
      %p180 = scmp.ne.s32.totalorder %s172, %s174
      %p181 = scmp.eq.s32.totalorder %s52, 1
      %p182 = por %p180, %p181
      %p183 = scmp.ne.s32.totalorder %s174, %s175
      %p184 = scmp.eq.s32.totalorder %s52, 0
      %p185 = por %p183, %p184
      %p186 = scmp.ne.s32.totalorder %s174, %s175
      %p187 = scmp.eq.s32.totalorder %s53, 1
      %p188 = por %p186, %p187
      %p190 = scmp.ne.s32.totalorder %s175, %s189
      %p191 = scmp.eq.s32.totalorder %s53, 0
      %p192 = por %p190, %p191
      %s194 = sadd.s32 %s193, 1
      %p197 = scmp.eq.s32.totalorder %s47, 1
      %p198 = scmp.ne.s32.totalorder %s193, %s195
      %p199 = scmp.eq.s32.totalorder %s47, 0
      %p200 = por %p198, %p199
      %p201 = scmp.ne.s32.totalorder %s193, %s195
      %p202 = scmp.eq.s32.totalorder %s52, 1
      %p203 = por %p201, %p202
      %p204 = scmp.ne.s32.totalorder %s195, %s196
      %p205 = scmp.eq.s32.totalorder %s52, 0
      %p206 = por %p204, %p205
      %p207 = scmp.ne.s32.totalorder %s195, %s196
      %p208 = scmp.eq.s32.totalorder %s53, 1
      %p209 = por %p207, %p208
      %p211 = scmp.ne.s32.totalorder %s196, %s210
      %p212 = scmp.eq.s32.totalorder %s53, 0
      %p213 = por %p211, %p212
      %s215 = sadd.s32 %s214, 1
      %p218 = scmp.eq.s32.totalorder %s47, 1
      %p219 = scmp.ne.s32.totalorder %s214, %s216
      %p220 = scmp.eq.s32.totalorder %s47, 0
      %p221 = por %p219, %p220
      %p222 = scmp.ne.s32.totalorder %s214, %s216
      %p223 = scmp.eq.s32.totalorder %s52, 1
      %p224 = por %p222, %p223
      %p225 = scmp.ne.s32.totalorder %s216, %s217
      %p226 = scmp.eq.s32.totalorder %s52, 0
      %p227 = por %p225, %p226
      %p228 = scmp.ne.s32.totalorder %s216, %s217
      %p229 = scmp.eq.s32.totalorder %s53, 1
      %p230 = por %p228, %p229
      %p232 = scmp.ne.s32.totalorder %s217, %s231
      %p233 = scmp.eq.s32.totalorder %s53, 0
      %p234 = por %p232, %p233
      %s236 = sadd.s32 %s235, 1
      %p239 = scmp.eq.s32.totalorder %s47, 1
      %p240 = scmp.ne.s32.totalorder %s235, %s237
      %p241 = scmp.eq.s32.totalorder %s47, 0
      %p242 = por %p240, %p241
      %p243 = scmp.ne.s32.totalorder %s235, %s237
      %p244 = scmp.eq.s32.totalorder %s52, 1
      %p245 = por %p243, %p244
      %p246 = scmp.ne.s32.totalorder %s237, %s238
      %p247 = scmp.eq.s32.totalorder %s52, 0
      %p248 = por %p246, %p247
      %p249 = scmp.ne.s32.totalorder %s237, %s238
      %p250 = scmp.eq.s32.totalorder %s53, 1
      %p251 = por %p249, %p250
      %p253 = scmp.ne.s32.totalorder %s238, %s252
      %p254 = scmp.eq.s32.totalorder %s53, 0
      %p255 = por %p253, %p254
      %s257 = sadd.s32 %s256, 1
      %p260 = scmp.eq.s32.totalorder %s47, 1
      %p261 = scmp.ne.s32.totalorder %s256, %s258
      %p262 = scmp.eq.s32.totalorder %s47, 0
      %p263 = por %p261, %p262
      %p264 = scmp.ne.s32.totalorder %s256, %s258
      %p265 = scmp.eq.s32.totalorder %s52, 1
      %p266 = por %p264, %p265
      %p267 = scmp.ne.s32.totalorder %s258, %s259
      %p268 = scmp.eq.s32.totalorder %s52, 0
      %p269 = por %p267, %p268
      %p270 = scmp.ne.s32.totalorder %s258, %s259
      %p271 = scmp.eq.s32.totalorder %s53, 1
      %p272 = por %p270, %p271
      %p274 = scmp.ne.s32.totalorder %s259, %s273
      %p275 = scmp.eq.s32.totalorder %s53, 0
      %p276 = por %p274, %p275
      %s278 = sadd.s32 %s277, 1
      %p281 = scmp.eq.s32.totalorder %s47, 1
      %p282 = scmp.ne.s32.totalorder %s277, %s279
      %p283 = scmp.eq.s32.totalorder %s47, 0
      %p284 = por %p282, %p283
      %p285 = scmp.ne.s32.totalorder %s277, %s279
      %p286 = scmp.eq.s32.totalorder %s52, 1
      %p287 = por %p285, %p286
      %p288 = scmp.ne.s32.totalorder %s279, %s280
      %p289 = scmp.eq.s32.totalorder %s52, 0
      %p290 = por %p288, %p289
      %p291 = scmp.ne.s32.totalorder %s279, %s280
      %p292 = scmp.eq.s32.totalorder %s53, 1
      %p293 = por %p291, %p292
      %p295 = scmp.ne.s32.totalorder %s280, %s294
      %p296 = scmp.eq.s32.totalorder %s53, 0
      %p297 = por %p295, %p296
      %s299 = sadd.s32 %s298, 1
      %p302 = scmp.eq.s32.totalorder %s47, 1
      %p303 = scmp.ne.s32.totalorder %s298, %s300
      %p304 = scmp.eq.s32.totalorder %s47, 0
      %p305 = por %p303, %p304
      %p306 = scmp.ne.s32.totalorder %s298, %s300
      %p307 = scmp.eq.s32.totalorder %s52, 1
      %p308 = por %p306, %p307
      %p309 = scmp.ne.s32.totalorder %s300, %s301
      %p310 = scmp.eq.s32.totalorder %s52, 0
      %p311 = por %p309, %p310
      %p312 = scmp.ne.s32.totalorder %s300, %s301
      %p313 = scmp.eq.s32.totalorder %s53, 1
      %p314 = por %p312, %p313
      %p316 = scmp.ne.s32.totalorder %s301, %s315
      %p317 = scmp.eq.s32.totalorder %s53, 0
      %p318 = por %p316, %p317
      %s319 = ssub.s32 %s55, %s69
      %p320 = scmp.eq.s32.totalorder %s319, 0
      %s322 = sadd.s32 %s321, 1
      %s323 = scalar_select %p320, %s321, %s322
      %p326 = pneg %p320
      %p327 = scmp.eq.s32.totalorder %s47, 1
      %p328 = por %p326, %p327
      %p329 = scmp.ne.s32.totalorder %s321, %s324
      %p330 = scmp.eq.s32.totalorder %s47, 0
      %p331 = por %p329, %p330
      %p332 = scmp.ne.s32.totalorder %s321, %s324
      %p333 = scmp.eq.s32.totalorder %s52, 1
      %p334 = por %p332, %p333
      %p335 = scmp.ne.s32.totalorder %s324, %s325
      %p336 = scmp.eq.s32.totalorder %s52, 0
      %p337 = por %p335, %p336
      %p338 = scmp.ne.s32.totalorder %s324, %s325
      %p339 = scmp.eq.s32.totalorder %s53, 1
      %p340 = por %p338, %p339
      %p342 = scmp.ne.s32.totalorder %s325, %s341
      %p343 = scmp.eq.s32.totalorder %s53, 0
      %p344 = por %p342, %p343
      %s345 = ssub.s32 %s55, %s69
      %p346 = scmp.eq.s32.totalorder %s345, 0
      %s348 = sadd.s32 %s347, 1
      %s349 = scalar_select %p346, %s347, %s348
      %p352 = pneg %p346
      %p353 = scmp.eq.s32.totalorder %s47, 1
      %p354 = por %p352, %p353
      %p355 = scmp.ne.s32.totalorder %s347, %s350
      %p356 = scmp.eq.s32.totalorder %s47, 0
      %p357 = por %p355, %p356
      %p358 = scmp.ne.s32.totalorder %s347, %s350
      %p359 = scmp.eq.s32.totalorder %s52, 1
      %p360 = por %p358, %p359
      %p361 = scmp.ne.s32.totalorder %s350, %s351
      %p362 = scmp.eq.s32.totalorder %s52, 0
      %p363 = por %p361, %p362
      %p364 = scmp.ne.s32.totalorder %s350, %s351
      %p365 = scmp.eq.s32.totalorder %s53, 1
      %p366 = por %p364, %p365
      %p368 = scmp.ne.s32.totalorder %s351, %s367
      %p369 = scmp.eq.s32.totalorder %s53, 0
      %p370 = por %p368, %p369
      %s371 = ssub.s32 %s55, %s69
      %p372 = scmp.eq.s32.totalorder %s371, 0
      %s374 = sadd.s32 %s373, 1
      %s375 = scalar_select %p372, %s373, %s374
      %p378 = pneg %p372
      %p379 = scmp.eq.s32.totalorder %s47, 1
      %p380 = por %p378, %p379
      %p381 = scmp.ne.s32.totalorder %s373, %s376
      %p382 = scmp.eq.s32.totalorder %s47, 0
      %p383 = por %p381, %p382
      %p384 = scmp.ne.s32.totalorder %s373, %s376
      %p385 = scmp.eq.s32.totalorder %s52, 1
      %p386 = por %p384, %p385
      %p387 = scmp.ne.s32.totalorder %s376, %s377
      %p388 = scmp.eq.s32.totalorder %s52, 0
      %p389 = por %p387, %p388
      %p390 = scmp.ne.s32.totalorder %s376, %s377
      %p391 = scmp.eq.s32.totalorder %s53, 1
      %p392 = por %p390, %p391
      %p394 = scmp.ne.s32.totalorder %s377, %s393
      %p395 = scmp.eq.s32.totalorder %s53, 0
      %p396 = por %p394, %p395
      %s397 = ssub.s32 %s55, %s69
      %p398 = scmp.eq.s32.totalorder %s397, 0
      %s400 = sadd.s32 %s399, 1
      %s401 = scalar_select %p398, %s399, %s400
      %p404 = pneg %p398
      %p405 = scmp.eq.s32.totalorder %s47, 1
      %p406 = por %p404, %p405
      %p407 = scmp.ne.s32.totalorder %s399, %s402
      %p408 = scmp.eq.s32.totalorder %s47, 0
      %p409 = por %p407, %p408
      %p410 = scmp.ne.s32.totalorder %s399, %s402
      %p411 = scmp.eq.s32.totalorder %s52, 1
      %p412 = por %p410, %p411
      %p413 = scmp.ne.s32.totalorder %s402, %s403
      %p414 = scmp.eq.s32.totalorder %s52, 0
      %p415 = por %p413, %p414
      %p416 = scmp.ne.s32.totalorder %s402, %s403
      %p417 = scmp.eq.s32.totalorder %s53, 1
      %p418 = por %p416, %p417
      %p420 = scmp.ne.s32.totalorder %s403, %s419
      %p421 = scmp.eq.s32.totalorder %s53, 0
      %p422 = por %p420, %p421
      %s423 = ssub.s32 %s56, %s65
      %p424 = scmp.eq.s32.totalorder %s423, 0
      %s426 = sadd.s32 %s425, 1
      %s427 = scalar_select %p424, %s425, %s426
      %p430 = pneg %p424
      %p431 = scmp.eq.s32.totalorder %s47, 1
      %p432 = por %p430, %p431
      %p433 = scmp.ne.s32.totalorder %s425, %s428
      %p434 = scmp.eq.s32.totalorder %s47, 0
      %p435 = por %p433, %p434
      %p436 = scmp.ne.s32.totalorder %s425, %s428
      %p437 = scmp.eq.s32.totalorder %s52, 1
      %p438 = por %p436, %p437
      %p439 = scmp.ne.s32.totalorder %s428, %s429
      %p440 = scmp.eq.s32.totalorder %s52, 0
      %p441 = por %p439, %p440
      %p442 = scmp.ne.s32.totalorder %s428, %s429
      %p443 = scmp.eq.s32.totalorder %s53, 1
      %p444 = por %p442, %p443
      %p446 = scmp.ne.s32.totalorder %s429, %s445
      %p447 = scmp.eq.s32.totalorder %s53, 0
      %p448 = por %p446, %p447
      %s449 = ssub.s32 %s56, %s65
      %p450 = scmp.eq.s32.totalorder %s449, 0
      %s452 = sadd.s32 %s451, 1
      %s453 = scalar_select %p450, %s451, %s452
      %p456 = pneg %p450
      %p457 = scmp.eq.s32.totalorder %s47, 1
      %p458 = por %p456, %p457
      %p459 = scmp.ne.s32.totalorder %s451, %s454
      %p460 = scmp.eq.s32.totalorder %s47, 0
      %p461 = por %p459, %p460
      %p462 = scmp.ne.s32.totalorder %s451, %s454
      %p463 = scmp.eq.s32.totalorder %s52, 1
      %p464 = por %p462, %p463
      %p465 = scmp.ne.s32.totalorder %s454, %s455
      %p466 = scmp.eq.s32.totalorder %s52, 0
      %p467 = por %p465, %p466
      %p468 = scmp.ne.s32.totalorder %s454, %s455
      %p469 = scmp.eq.s32.totalorder %s53, 1
      %p470 = por %p468, %p469
      %p472 = scmp.ne.s32.totalorder %s455, %s471
      %p473 = scmp.eq.s32.totalorder %s53, 0
      %p474 = por %p472, %p473
      %s475 = ssub.s32 %s54, %s73
      %s476 = ssub.s32 %s55, %s69
      %s477 = sor.u32 %s475, %s476
      %p478 = scmp.eq.s32.totalorder %s477, 0
      %s480 = sadd.s32 %s479, 1
      %s481 = scalar_select %p478, %s479, %s480
      %p484 = pneg %p478
      %p485 = scmp.eq.s32.totalorder %s47, 1
      %p486 = por %p484, %p485
      %p487 = scmp.ne.s32.totalorder %s479, %s482
      %p488 = scmp.eq.s32.totalorder %s47, 0
      %p489 = por %p487, %p488
      %p490 = scmp.ne.s32.totalorder %s479, %s482
      %p491 = scmp.eq.s32.totalorder %s52, 1
      %p492 = por %p490, %p491
      %p493 = scmp.ne.s32.totalorder %s482, %s483
      %p494 = scmp.eq.s32.totalorder %s52, 0
      %p495 = por %p493, %p494
      %p496 = scmp.ne.s32.totalorder %s482, %s483
      %p497 = scmp.eq.s32.totalorder %s53, 1
      %p498 = por %p496, %p497
      %p500 = scmp.ne.s32.totalorder %s483, %s499
      %p501 = scmp.eq.s32.totalorder %s53, 0
      %p502 = por %p500, %p501
      %s503 = ssub.s32 %s54, %s73
      %s504 = ssub.s32 %s55, %s69
      %s505 = sor.u32 %s503, %s504
      %p506 = scmp.eq.s32.totalorder %s505, 0
      %s508 = sadd.s32 %s507, 1
      %s509 = scalar_select %p506, %s507, %s508
      %p512 = pneg %p506
      %p513 = scmp.eq.s32.totalorder %s47, 1
      %p514 = por %p512, %p513
      %p515 = scmp.ne.s32.totalorder %s507, %s510
      %p516 = scmp.eq.s32.totalorder %s47, 0
      %p517 = por %p515, %p516
      %p518 = scmp.ne.s32.totalorder %s507, %s510
      %p519 = scmp.eq.s32.totalorder %s52, 1
      %p520 = por %p518, %p519
      %p521 = scmp.ne.s32.totalorder %s510, %s511
      %p522 = scmp.eq.s32.totalorder %s52, 0
      %p523 = por %p521, %p522
      %p524 = scmp.ne.s32.totalorder %s510, %s511
      %p525 = scmp.eq.s32.totalorder %s53, 1
      %p526 = por %p524, %p525
      %p528 = scmp.ne.s32.totalorder %s511, %s527
      %p529 = scmp.eq.s32.totalorder %s53, 0
      %p530 = por %p528, %p529
      %s531 = ssub.s32 %s54, %s73
      %s532 = ssub.s32 %s55, %s69
      %s533 = sor.u32 %s531, %s532
      %p534 = scmp.eq.s32.totalorder %s533, 0
      %s536 = sadd.s32 %s535, 1
      %s537 = scalar_select %p534, %s535, %s536
      %p540 = pneg %p534
      %p541 = scmp.eq.s32.totalorder %s47, 1
      %p542 = por %p540, %p541
      %p543 = scmp.ne.s32.totalorder %s535, %s538
      %p544 = scmp.eq.s32.totalorder %s47, 0
      %p545 = por %p543, %p544
      %p546 = scmp.ne.s32.totalorder %s535, %s538
      %p547 = scmp.eq.s32.totalorder %s52, 1
      %p548 = por %p546, %p547
      %p549 = scmp.ne.s32.totalorder %s538, %s539
      %p550 = scmp.eq.s32.totalorder %s52, 0
      %p551 = por %p549, %p550
      %p552 = scmp.ne.s32.totalorder %s538, %s539
      %p553 = scmp.eq.s32.totalorder %s53, 1
      %p554 = por %p552, %p553
      %p556 = scmp.ne.s32.totalorder %s539, %s555
      %p557 = scmp.eq.s32.totalorder %s53, 0
      %p558 = por %p556, %p557
      %p559 = scmp.le.s32.totalorder 1, %s47
      %p560 = scmp.lt.s32.totalorder %s47, 3
      %p561 = pnand %p559, %p560
      %p562 = pneg %p561
      // Predicated region
      $region9: #{tpu_custom_call.1} parent=5 // pred_check
        _
      $region10: #{tpu_custom_call.1} parent=5 // pred_check_branch
        %564 = sbr.rel (%p561) target = $region12
      $region11: #{tpu_custom_call.1} parent=5 // pred_region
        %s565 = ssub.s32 %s47, 1
        // Predicated region
        $region13: #{tpu_custom_call.1} parent=11 // pred_check
          %p566 = pneg %p143
        $region14: #{tpu_custom_call.1} parent=11 // pred_check_branch
          %568 = sbr.rel (%p566) target = $region16
        $region15: #{tpu_custom_call.1} parent=11 // pred_region
          %s570 = ssub.s32 256, 256
          %571 = vsyncadd [#allocation12], %s570
          %s572 = sshll.u32 [#allocation13], 4
          %s573 = int_to_ptr.vmem [resolvable:$true] %s572
          %578 = dma.hbm_to_vmem [thread:$0]  %s3, 256, %s573, [#allocation12], 64, 64, 4
        $region16: #{tpu_custom_call.1} parent=11 // pred_fallthru
          _
        // Predicated region
        $region17: #{tpu_custom_call.1} parent=11 // pred_check
          %p579 = pneg %p164
        $region18: #{tpu_custom_call.1} parent=11 // pred_check_branch
          %581 = sbr.rel (%p579) target = $region20
        $region19: #{tpu_custom_call.1} parent=11 // pred_region
          %s583 = ssub.s32 16, 16
          %584 = vsyncadd [#allocation15], %s583
          %s586 = sshll.u32 [#allocation14], 4
          %s587 = int_to_ptr.vmem [resolvable:$true] %s586
          %589 = dma.hbm_to_vmem [thread:$0]  %s4, 16, %s587, [#allocation15]
        $region20: #{tpu_custom_call.1} parent=11 // pred_fallthru
          _
        // Predicated region
        $region21: #{tpu_custom_call.1} parent=11 // pred_check
          %p590 = pneg %p185
        $region22: #{tpu_custom_call.1} parent=11 // pred_check_branch
          %592 = sbr.rel (%p590) target = $region24
        $region23: #{tpu_custom_call.1} parent=11 // pred_region
          %s594 = ssub.s32 16, 16
          %595 = vsyncadd [#allocation15], %s594
          %s597 = sshll.u32 [#allocation16], 4
          %s598 = int_to_ptr.vmem [resolvable:$true] %s597
          %600 = dma.hbm_to_vmem [thread:$0]  %s5, 16, %s598, [#allocation15]
        $region24: #{tpu_custom_call.1} parent=11 // pred_fallthru
          _
        // Predicated region
        $region25: #{tpu_custom_call.1} parent=11 // pred_check
          %p601 = pneg %p206
        $region26: #{tpu_custom_call.1} parent=11 // pred_check_branch
          %603 = sbr.rel (%p601) target = $region28
        $region27: #{tpu_custom_call.1} parent=11 // pred_region
          %s605 = ssub.s32 256, 256
          %606 = vsyncadd [#allocation18], %s605
          %s607 = sshll.u32 [#allocation17], 4
          %s608 = int_to_ptr.vmem [resolvable:$true] %s607
          %613 = dma.hbm_to_vmem [thread:$0]  %s6, 256, %s608, [#allocation18], 64, 64, 4
        $region28: #{tpu_custom_call.1} parent=11 // pred_fallthru
          _
        // Predicated region
        $region29: #{tpu_custom_call.1} parent=11 // pred_check
          %p614 = pneg %p227
        $region30: #{tpu_custom_call.1} parent=11 // pred_check_branch
          %616 = sbr.rel (%p614) target = $region32
        $region31: #{tpu_custom_call.1} parent=11 // pred_region
          %s618 = ssub.s32 256, 256
          %619 = vsyncadd [#allocation18], %s618
          %s620 = sshll.u32 [#allocation19], 4
          %s621 = int_to_ptr.vmem [resolvable:$true] %s620
          %626 = dma.hbm_to_vmem [thread:$0]  %s7, 256, %s621, [#allocation18], 64, 64, 4
        $region32: #{tpu_custom_call.1} parent=11 // pred_fallthru
          _
        // Predicated region
        $region33: #{tpu_custom_call.1} parent=11 // pred_check
          %p627 = pneg %p248
        $region34: #{tpu_custom_call.1} parent=11 // pred_check_branch
          %629 = sbr.rel (%p627) target = $region36
        $region35: #{tpu_custom_call.1} parent=11 // pred_region
          %s631 = ssub.s32 16, 16
          %632 = vsyncadd [#allocation21], %s631
          %s634 = sshll.u32 [#allocation20], 4
          %s635 = int_to_ptr.vmem [resolvable:$true] %s634
          %637 = dma.hbm_to_vmem [thread:$0]  %s8, 16, %s635, [#allocation21]
        $region36: #{tpu_custom_call.1} parent=11 // pred_fallthru
          _
        // Predicated region
        $region37: #{tpu_custom_call.1} parent=11 // pred_check
          %p638 = pneg %p269
        $region38: #{tpu_custom_call.1} parent=11 // pred_check_branch
          %640 = sbr.rel (%p638) target = $region40
        $region39: #{tpu_custom_call.1} parent=11 // pred_region
          _
        $region40: #{tpu_custom_call.1} parent=11 // pred_fallthru
          _
        // Predicated region
        $region41: #{tpu_custom_call.1} parent=11 // pred_check
          %p641 = pneg %p290
        $region42: #{tpu_custom_call.1} parent=11 // pred_check_branch
          %643 = sbr.rel (%p641) target = $region44
        $region43: #{tpu_custom_call.1} parent=11 // pred_region
          %s645 = ssub.s32 256, 256
          %646 = vsyncadd [#allocation21], %s645
          %s647 = sshll.u32 [#allocation22], 4
          %s648 = int_to_ptr.vmem [resolvable:$true] %s647
          %653 = dma.hbm_to_vmem [thread:$0]  %s10, 256, %s648, [#allocation21], 64, 64, 4
        $region44: #{tpu_custom_call.1} parent=11 // pred_fallthru
          _
        // Predicated region
        $region45: #{tpu_custom_call.1} parent=11 // pred_check
          %p654 = pneg %p311
        $region46: #{tpu_custom_call.1} parent=11 // pred_check_branch
          %656 = sbr.rel (%p654) target = $region48
        $region47: #{tpu_custom_call.1} parent=11 // pred_region
          %s658 = ssub.s32 256, 256
          %659 = vsyncadd [#allocation24], %s658
          %s660 = sshll.u32 [#allocation23], 4
          %s661 = int_to_ptr.vmem [resolvable:$true] %s660
          %666 = dma.hbm_to_vmem [thread:$0]  %s11, 256, %s661, [#allocation24], 64, 64, 4
        $region48: #{tpu_custom_call.1} parent=11 // pred_fallthru
          _
        // Predicated region
        $region49: #{tpu_custom_call.1} parent=11 // pred_check
          %p667 = pneg %p337
        $region50: #{tpu_custom_call.1} parent=11 // pred_check_branch
          %669 = sbr.rel (%p667) target = $region52
        $region51: #{tpu_custom_call.1} parent=11 // pred_region
          %s670 = smul.u32 2, %s58
          %s672 = ssub.s32 256, 256
          %673 = vsyncadd [#allocation24], %s672
          %s674 = smul.addr %s670, 128
          %s675 = scalar_lea.hbm %s12, %s674
          %s676 = sshll.u32 [#allocation25], 4
          %s677 = int_to_ptr.vmem [resolvable:$true] %s676
          %682 = dma.hbm_to_vmem [thread:$0]  %s675, 256, %s677, [#allocation24], 128, 128, 8
        $region52: #{tpu_custom_call.1} parent=11 // pred_fallthru
          _
        // Predicated region
        $region53: #{tpu_custom_call.1} parent=11 // pred_check
          %p683 = pneg %p363
        $region54: #{tpu_custom_call.1} parent=11 // pred_check_branch
          %685 = sbr.rel (%p683) target = $region56
        $region55: #{tpu_custom_call.1} parent=11 // pred_region
          %s686 = smul.u32 2, %s58
          %s688 = ssub.s32 256, 256
          %689 = vsyncadd [#allocation27], %s688
          %s690 = smul.addr %s686, 128
          %s691 = scalar_lea.hbm %s13, %s690
          %s692 = sshll.u32 [#allocation26], 4
          %s693 = int_to_ptr.vmem [resolvable:$true] %s692
          %698 = dma.hbm_to_vmem [thread:$0]  %s691, 256, %s693, [#allocation27], 128, 128, 8
        $region56: #{tpu_custom_call.1} parent=11 // pred_fallthru
          _
        // Predicated region
        $region57: #{tpu_custom_call.1} parent=11 // pred_check
          %p699 = pneg %p389
        $region58: #{tpu_custom_call.1} parent=11 // pred_check_branch
          %701 = sbr.rel (%p699) target = $region60
        $region59: #{tpu_custom_call.1} parent=11 // pred_region
          %s702 = smul.u32 2, %s58
          %s704 = ssub.s32 256, 256
          %705 = vsyncadd [#allocation27], %s704
          %s706 = smul.addr %s702, 128
          %s707 = scalar_lea.hbm %s14, %s706
          %s708 = sshll.u32 [#allocation28], 4
          %s709 = int_to_ptr.vmem [resolvable:$true] %s708
          %714 = dma.hbm_to_vmem [thread:$0]  %s707, 256, %s709, [#allocation27], 128, 128, 8
        $region60: #{tpu_custom_call.1} parent=11 // pred_fallthru
          _
        // Predicated region
        $region61: #{tpu_custom_call.1} parent=11 // pred_check
          %p715 = pneg %p415
        $region62: #{tpu_custom_call.1} parent=11 // pred_check_branch
          %717 = sbr.rel (%p715) target = $region64
        $region63: #{tpu_custom_call.1} parent=11 // pred_region
          %s718 = smul.u32 2, %s58
          %s720 = ssub.s32 256, 256
          %721 = vsyncadd [#allocation30], %s720
          %s722 = smul.addr %s718, 128
          %s723 = scalar_lea.hbm %s15, %s722
          %s724 = sshll.u32 [#allocation29], 4
          %s725 = int_to_ptr.vmem [resolvable:$true] %s724
          %730 = dma.hbm_to_vmem [thread:$0]  %s723, 256, %s725, [#allocation30], 128, 128, 8
        $region64: #{tpu_custom_call.1} parent=11 // pred_fallthru
          _
        // Predicated region
        $region65: #{tpu_custom_call.1} parent=11 // pred_check
          %p731 = pneg %p441
        $region66: #{tpu_custom_call.1} parent=11 // pred_check_branch
          %733 = sbr.rel (%p731) target = $region68
        $region67: #{tpu_custom_call.1} parent=11 // pred_region
          %s734 = smul.u32 2, %s59
          %s736 = ssub.s32 256, 256
          %737 = vsyncadd [#allocation30], %s736
          %s738 = smul.addr %s734, 128
          %s739 = scalar_lea.hbm %s16, %s738
          %s740 = sshll.u32 [#allocation31], 4
          %s741 = int_to_ptr.vmem [resolvable:$true] %s740
          %746 = dma.hbm_to_vmem [thread:$0]  %s739, 256, %s741, [#allocation30], 128, 128, 8
        $region68: #{tpu_custom_call.1} parent=11 // pred_fallthru
          _
        // Predicated region
        $region69: #{tpu_custom_call.1} parent=11 // pred_check
          %p747 = pneg %p467
        $region70: #{tpu_custom_call.1} parent=11 // pred_check_branch
          %749 = sbr.rel (%p747) target = $region72
        $region71: #{tpu_custom_call.1} parent=11 // pred_region
          %s750 = smul.u32 2, %s59
          %s752 = ssub.s32 256, 256
          %753 = vsyncadd [#allocation33], %s752
          %s754 = smul.addr %s750, 128
          %s755 = scalar_lea.hbm %s17, %s754
          %s756 = sshll.u32 [#allocation32], 4
          %s757 = int_to_ptr.vmem [resolvable:$true] %s756
          %762 = dma.hbm_to_vmem [thread:$0]  %s755, 256, %s757, [#allocation33], 128, 128, 8
        $region72: #{tpu_custom_call.1} parent=11 // pred_fallthru
          _
      $region12: #{tpu_custom_call.1} parent=5 // pred_fallthru
        _
      %p763 = scmp.lt.s32.totalorder %s47, 2
      // Predicated region
      $region73: #{tpu_custom_call.1} parent=5 // pred_check
        %p764 = pneg %p763
      $region74: #{tpu_custom_call.1} parent=5 // pred_check_branch
        %766 = sbr.rel (%p764) target = $region76
      $region75: #{tpu_custom_call.1} parent=5 // pred_region
        // Predicated region
        $region77: #{tpu_custom_call.1} parent=75 // pred_check
          %p767 = pneg %p88
        $region78: #{tpu_custom_call.1} parent=75 // pred_check_branch
          %769 = sbr.rel (%p767) target = $region80
        $region79: #{tpu_custom_call.1} parent=75 // pred_region
          %s770 = sand.u32 %s78, 1
          %s771 = scalar_lea.sflag [#allocation9], %s770
          %s772 = sand.u32 %s78, 1
          %s773 = smul.addr %s772, 16
          %s774 = scalar_lea.vmem [#allocation8], %s773
          %s775 = smul.u32 2, %s55
          %s777 = ssub.s32 256, 256
          %778 = vsyncadd %s771, %s777
          %s779 = smul.addr %s54, 2
          %s780 = sadd.s32 %s775, %s779
          %s781 = smul.addr %s780, 128
          %s782 = scalar_lea.hbm %s1, %s781
          %s783 = sshll.u32 %s774, 4
          %s784 = int_to_ptr.vmem [resolvable:$true] %s783
          %789 = dma.hbm_to_vmem [thread:$0]  %s782, 256, %s784, %s771, 128, 128, 8
        $region80: #{tpu_custom_call.1} parent=75 // pred_fallthru
          _
        // Predicated region
        $region81: #{tpu_custom_call.1} parent=75 // pred_check
          %p790 = pneg %p116
        $region82: #{tpu_custom_call.1} parent=75 // pred_check_branch
          %792 = sbr.rel (%p790) target = $region84
        $region83: #{tpu_custom_call.1} parent=75 // pred_region
          %s793 = sand.u32 %s47, 1
          %s794 = scalar_lea.sflag [#allocation12], %s793
          %s795 = sand.u32 %s106, 1
          %s796 = smul.addr %s795, 16
          %s797 = scalar_lea.vmem [#allocation11], %s796
          %s798 = smul.u32 2, %s56
          %s800 = ssub.s32 256, 256
          %801 = vsyncadd %s794, %s800
          %s802 = smul.addr %s54, 2
          %s803 = sadd.s32 %s798, %s802
          %s804 = smul.addr %s803, 128
          %s805 = scalar_lea.hbm %s2, %s804
          %s806 = sshll.u32 %s797, 4
          %s807 = int_to_ptr.vmem [resolvable:$true] %s806
          %812 = dma.hbm_to_vmem [thread:$0]  %s805, 256, %s807, %s794, 128, 128, 8
        $region84: #{tpu_custom_call.1} parent=75 // pred_fallthru
          _
      $region76: #{tpu_custom_call.1} parent=5 // pred_fallthru
        _
      %p813 = scmp.le.s32.totalorder 1, %s47
      %p814 = scmp.lt.s32.totalorder %s47, 3
      %p815 = pnand %p813, %p814
      %p816 = pneg %p815
      // Predicated region
      $region85: #{tpu_custom_call.1} parent=5 // pred_check
        _
      $region86: #{tpu_custom_call.1} parent=5 // pred_check_branch
        %818 = sbr.rel (%p815) target = $region88
      $region87: #{tpu_custom_call.1} parent=5 // pred_region
        %s819 = ssub.s32 %s47, 1
        %s820 = sand.u32 %s81, 1
        %s821 = scalar_lea.sflag [#allocation9], %s820
        %s822 = sand.u32 %s81, 1
        %s823 = smul.addr %s822, 16
        %s824 = scalar_lea.vmem [#allocation8], %s823
        // Predicated region
        $region89: #{tpu_custom_call.1} parent=87 // pred_check
          %p825 = pneg %p94
        $region90: #{tpu_custom_call.1} parent=87 // pred_check_branch
          %827 = sbr.rel (%p825) target = $region92
        $region91: #{tpu_custom_call.1} parent=87 // pred_region
          %828 = dma.done %s821, 256
        $region92: #{tpu_custom_call.1} parent=87 // pred_fallthru
          _
        %s829 = sand.u32 %s52, 1
        %s830 = scalar_lea.sflag [#allocation12], %s829
        %s831 = sand.u32 %s109, 1
        %s832 = smul.addr %s831, 16
        %s833 = scalar_lea.vmem [#allocation11], %s832
        // Predicated region
        $region93: #{tpu_custom_call.1} parent=87 // pred_check
          %p834 = pneg %p122
        $region94: #{tpu_custom_call.1} parent=87 // pred_check_branch
          %836 = sbr.rel (%p834) target = $region96
        $region95: #{tpu_custom_call.1} parent=87 // pred_region
          %837 = dma.done %s830, 256
        $region96: #{tpu_custom_call.1} parent=87 // pred_fallthru
          _
        // Predicated region
        $region97: #{tpu_custom_call.1} parent=87 // pred_check
          %p838 = pneg %p143
        $region98: #{tpu_custom_call.1} parent=87 // pred_check_branch
          %840 = sbr.rel (%p838) target = $region100
        $region99: #{tpu_custom_call.1} parent=87 // pred_region
          %841 = dma.done [#allocation12], 256
        $region100: #{tpu_custom_call.1} parent=87 // pred_fallthru
          _
        // Predicated region
        $region101: #{tpu_custom_call.1} parent=87 // pred_check
          %p842 = pneg %p164
        $region102: #{tpu_custom_call.1} parent=87 // pred_check_branch
          %844 = sbr.rel (%p842) target = $region104
        $region103: #{tpu_custom_call.1} parent=87 // pred_region
          %845 = dma.done [#allocation15], 16
        $region104: #{tpu_custom_call.1} parent=87 // pred_fallthru
          _
        // Predicated region
        $region105: #{tpu_custom_call.1} parent=87 // pred_check
          %p846 = pneg %p185
        $region106: #{tpu_custom_call.1} parent=87 // pred_check_branch
          %848 = sbr.rel (%p846) target = $region108
        $region107: #{tpu_custom_call.1} parent=87 // pred_region
          %849 = dma.done [#allocation15], 16
        $region108: #{tpu_custom_call.1} parent=87 // pred_fallthru
          _
        // Predicated region
        $region109: #{tpu_custom_call.1} parent=87 // pred_check
          %p850 = pneg %p206
        $region110: #{tpu_custom_call.1} parent=87 // pred_check_branch
          %852 = sbr.rel (%p850) target = $region112
        $region111: #{tpu_custom_call.1} parent=87 // pred_region
          %853 = dma.done [#allocation18], 256
        $region112: #{tpu_custom_call.1} parent=87 // pred_fallthru
          _
        // Predicated region
        $region113: #{tpu_custom_call.1} parent=87 // pred_check
          %p854 = pneg %p227
        $region114: #{tpu_custom_call.1} parent=87 // pred_check_branch
          %856 = sbr.rel (%p854) target = $region116
        $region115: #{tpu_custom_call.1} parent=87 // pred_region
          %857 = dma.done [#allocation18], 256
        $region116: #{tpu_custom_call.1} parent=87 // pred_fallthru
          _
        // Predicated region
        $region117: #{tpu_custom_call.1} parent=87 // pred_check
          %p858 = pneg %p248
        $region118: #{tpu_custom_call.1} parent=87 // pred_check_branch
          %860 = sbr.rel (%p858) target = $region120
        $region119: #{tpu_custom_call.1} parent=87 // pred_region
          %861 = dma.done [#allocation21], 16
        $region120: #{tpu_custom_call.1} parent=87 // pred_fallthru
          _
        // Predicated region
        $region121: #{tpu_custom_call.1} parent=87 // pred_check
          %p862 = pneg %p290
        $region122: #{tpu_custom_call.1} parent=87 // pred_check_branch
          %864 = sbr.rel (%p862) target = $region124
        $region123: #{tpu_custom_call.1} parent=87 // pred_region
          %865 = dma.done [#allocation21], 256
        $region124: #{tpu_custom_call.1} parent=87 // pred_fallthru
          _
        // Predicated region
        $region125: #{tpu_custom_call.1} parent=87 // pred_check
          %p866 = pneg %p311
        $region126: #{tpu_custom_call.1} parent=87 // pred_check_branch
          %868 = sbr.rel (%p866) target = $region128
        $region127: #{tpu_custom_call.1} parent=87 // pred_region
          %869 = dma.done [#allocation24], 256
        $region128: #{tpu_custom_call.1} parent=87 // pred_fallthru
          _
        // Predicated region
        $region129: #{tpu_custom_call.1} parent=87 // pred_check
          %p870 = pneg %p337
        $region130: #{tpu_custom_call.1} parent=87 // pred_check_branch
          %872 = sbr.rel (%p870) target = $region132
        $region131: #{tpu_custom_call.1} parent=87 // pred_region
          %873 = dma.done [#allocation24], 256
        $region132: #{tpu_custom_call.1} parent=87 // pred_fallthru
          _
        // Predicated region
        $region133: #{tpu_custom_call.1} parent=87 // pred_check
          %p874 = pneg %p363
        $region134: #{tpu_custom_call.1} parent=87 // pred_check_branch
          %876 = sbr.rel (%p874) target = $region136
        $region135: #{tpu_custom_call.1} parent=87 // pred_region
          %877 = dma.done [#allocation27], 256
        $region136: #{tpu_custom_call.1} parent=87 // pred_fallthru
          _
        // Predicated region
        $region137: #{tpu_custom_call.1} parent=87 // pred_check
          %p878 = pneg %p389
        $region138: #{tpu_custom_call.1} parent=87 // pred_check_branch
          %880 = sbr.rel (%p878) target = $region140
        $region139: #{tpu_custom_call.1} parent=87 // pred_region
          %881 = dma.done [#allocation27], 256
        $region140: #{tpu_custom_call.1} parent=87 // pred_fallthru
          _
        // Predicated region
        $region141: #{tpu_custom_call.1} parent=87 // pred_check
          %p882 = pneg %p415
        $region142: #{tpu_custom_call.1} parent=87 // pred_check_branch
          %884 = sbr.rel (%p882) target = $region144
        $region143: #{tpu_custom_call.1} parent=87 // pred_region
          %885 = dma.done [#allocation30], 256
        $region144: #{tpu_custom_call.1} parent=87 // pred_fallthru
          _
        // Predicated region
        $region145: #{tpu_custom_call.1} parent=87 // pred_check
          %p886 = pneg %p441
        $region146: #{tpu_custom_call.1} parent=87 // pred_check_branch
          %888 = sbr.rel (%p886) target = $region148
        $region147: #{tpu_custom_call.1} parent=87 // pred_region
          %889 = dma.done [#allocation30], 256
        $region148: #{tpu_custom_call.1} parent=87 // pred_fallthru
          _
        // Predicated region
        $region149: #{tpu_custom_call.1} parent=87 // pred_check
          %p890 = pneg %p467
        $region150: #{tpu_custom_call.1} parent=87 // pred_check_branch
          %892 = sbr.rel (%p890) target = $region152
        $region151: #{tpu_custom_call.1} parent=87 // pred_region
          %893 = dma.done [#allocation33], 256
        $region152: #{tpu_custom_call.1} parent=87 // pred_fallthru
          _
        %s894 = sand.u32 %s81, 1
        %s895 = scalar_lea.sflag [#allocation9], %s894
        %s896 = sand.u32 %s81, 1
        %s897 = smul.addr %s896, 16
        %s898 = scalar_lea.vmem [#allocation8], %s897
        %p899 = pneg %p94
        %p900 = pneg %p91
        %s901 = sand.u32 %s52, 1
        %s902 = scalar_lea.sflag [#allocation12], %s901
        %s903 = sand.u32 %s109, 1
        %s904 = smul.addr %s903, 16
        %s905 = scalar_lea.vmem [#allocation11], %s904
        %p906 = pneg %p122
        %p907 = pneg %p119
        %p908 = pneg %p143
        %p909 = pneg %p140
        %p910 = pneg %p164
        %p911 = pneg %p161
        %p912 = pneg %p185
        %p913 = pneg %p182
        %p914 = pneg %p206
        %p915 = pneg %p203
        %p916 = pneg %p227
        %p917 = pneg %p224
        %p918 = pneg %p248
        %p919 = pneg %p245
        %p920 = pneg %p269
        %p921 = pneg %p266
        %p922 = pneg %p290
        %p923 = pneg %p287
        %p924 = pneg %p311
        %p925 = pneg %p308
        %p926 = pneg %p337
        %p927 = pneg %p334
        %p928 = pneg %p363
        %p929 = pneg %p360
        %p930 = pneg %p389
        %p931 = pneg %p386
        %p932 = pneg %p415
        %p933 = pneg %p412
        %p934 = pneg %p441
        %p935 = pneg %p438
        %p936 = pneg %p467
        %p937 = pneg %p464
        %p938 = pneg %p495
        %p939 = pneg %p492
        %s940 = sand.u32 %s482, 1
        %s941 = scalar_lea.sflag [#allocation10], %s940
        %s942 = sand.u32 %s482, 1
        %s943 = smul.addr %s942, 16
        %s944 = scalar_lea.vmem [#allocation34], %s943
        %p945 = pneg %p523
        %p946 = pneg %p520
        %s947 = sand.u32 %s52, 1
        %s948 = scalar_lea.sflag [#allocation36], %s947
        %s949 = sand.u32 %s510, 1
        %s950 = smul.addr %s949, 16
        %s951 = scalar_lea.vmem [#allocation35], %s950
        %p952 = pneg %p551
        %p953 = pneg %p548
        %s954 = sand.u32 %s52, 1
        %s955 = scalar_lea.sflag [#allocation36], %s954
        %s956 = sand.u32 %s538, 1
        %s957 = smul.addr %s956, 16
        %s958 = scalar_lea.vmem [#allocation37], %s957
        %s959 = smul.u32 2, %s58
        %s960 = smul.u32 2, %s59
        %s961 = smul.u32 2, %s58
        %s962 = smul.u32 2, %s58
        %s963 = smul.u32 2, %s58
        %s964 = smul.u32 2, %s58
        %s965 = smul.u32 2, %s59
        %s966 = smul.u32 2, %s59
        %s967 = smul.u32 2, %s58
        %s968 = smul.u32 2, %s58
        %s969 = smul.u32 2, %s58
        %s971 = sld [smem:[#allocation7]]
        %p972 = scmp.eq.s32.totalorder %s59, 0
        // Predicated region
        $region153: #{tpu_custom_call.1} parent=87 // pred_check
          %p973 = pneg %p972
        $region154: #{tpu_custom_call.1} parent=87 // pred_check_branch
          %975 = sbr.rel (%p973) target = $region156
        $region155: #{tpu_custom_call.1} parent=87 // pred_region
          %v976 = vld [vmem:[%s824] sm:$0xff]
          %v977 = vld [vmem:[%s824 + $0x8] sm:$0xff]
          %v978 = vpack.c.bf16 %v977, %v976
          %v979 = vld [vmem:[#allocation13] sm:$0xf]
          %v980 = vld [vmem:[#allocation13 + $0x4] sm:$0xf]
          %v981 = vld [vmem:[#allocation13 + $0x8] sm:$0xf]
          %v982 = vld [vmem:[#allocation13 + $0xc] sm:$0xf]
          %v987 = vunpack.c.l.b16 %v979
          %v988 = vunpack.c.l.b16 %v980
          %v989 = vunpack.c.l.b16 %v981
          %v990 = vunpack.c.l.b16 %v982
          %v991 = vpack.c.b16 %v988, %v987
          %v992 = vpack.c.b16 %v990, %v989
          %vm995 = vcmask 261120
          %v997 = vsel %vm995, %v978, 0
          %999 = vmatprep.subr.bf16.mxu0 0
          %1000 = vmatpush1.bf16.msra.mxu0 0
          %1001 = vmatprep.subr.bf16.mxu0 0
          %1002 = vmatpush1.bf16.msra.mxu0 0
          %1003 = vmatprep.subr.bf16.mxu0 0
          %1004 = vmatpush1.bf16.msra.mxu0 0
          %1005 = vmatprep.subr.bf16.mxu0 0
          %1006 = vmatpush1.bf16.msra.mxu0 0
          %1007 = vmatprep.subr.bf16.mxu0 0
          %1008 = vmatpush1.bf16.msra.mxu0 0
          %1009 = vmatprep.subr.bf16.mxu0 0
          %1010 = vmatpush1.bf16.msra.mxu0 0
          %1011 = vmatprep.subr.bf16.mxu0 0
          %1012 = vmatpush1.bf16.msra.mxu0 %v992
          %1013 = vmatprep.subr.bf16.mxu0 0
          %1014 = vmatpush1.bf16.msra.mxu0 %v991
          %1015 = vmatprep.subr.bf16.mxu0 0
          %1016 = vmatpush2.bf16.msra.mxu0 0
          %1017 = vmatprep.subr.bf16.mxu0 0
          %1018 = vmatpush2.bf16.msra.mxu0 0
          %1019 = vmatprep.subr.bf16.mxu0 0
          %1020 = vmatpush2.bf16.msra.mxu0 0
          %1021 = vmatprep.subr.bf16.mxu0 0
          %1022 = vmatpush2.bf16.msra.mxu0 0
          %1023 = vmatprep.subr.bf16.mxu0 0
          %1024 = vmatpush2.bf16.msra.mxu0 0
          %1025 = vmatprep.subr.bf16.mxu0 0
          %1026 = vmatpush2.bf16.msra.mxu0 0
          %1027 = vmatprep.subr.bf16.mxu0 0
          %1028 = vmatpush2.bf16.msra.mxu0 0
          %1029 = vmatprep.subr.bf16.mxu0 0
          %1030 = vmatpush2.bf16.msra.mxu0 0
          %1031 = vmatprep.mubr.bf16.mxu0 0
          %1032 = vmatmul.mubr.bf16.gmra.mxu0 %v997
          %v1033 = vpop.f32.mrf.mxu0
          %v1034 = vadd.f32 0.0, %v1033
          %v1035 = vpop.f32.mrf.mxu0
          %v1036 = vpop.f32.mrf.mxu0
          %v1037 = vadd.f32 0.0, %v1036
          %v1038 = vpop.f32.mrf.mxu0
          %1039 = vdwg.mxu0
          %v1040 = vsel %vm995, %v1034, 0.0
          %1041 = vadd.xlane.f32.xlu0 %v1040
          %v1042 = vpop.xlane.xlu0 %1041
          %v1043 = vsel %vm995, %v1037, 0.0
          %1044 = vadd.xlane.f32.xlu0 %v1043
          %v1045 = vpop.xlane.xlu0 %1044
          %v1046 = vrcp.pop 32.0
          %v1047 = vmul.f32 %v1042, %v1046
          %v1048 = vmul.f32 %v1045, %v1046
          %v1049 = vsub.f32 %v1034, %v1047
          %v1050 = vsub.f32 %v1037, %v1048
          %v1051 = vmul.f32 %v1049, %v1049
          %v1052 = vmul.f32 %v1050, %v1050
          %v1053 = vsel %vm995, %v1051, 0.0
          %1054 = vadd.xlane.f32.xlu0 %v1053
          %v1055 = vpop.xlane.xlu0 %1054
          %v1056 = vsel %vm995, %v1052, 0.0
          %1057 = vadd.xlane.f32.xlu0 %v1056
          %v1058 = vpop.xlane.xlu0 %1057
          %v1059 = vmul.f32 %v1055, %v1046
          %v1060 = vmul.f32 %v1058, %v1046
          %v1061 = vadd.f32 %v1059, 1e-05
          %v1062 = vadd.f32 %v1060, 1e-05
          %v1063 = vrsqrt.pop %v1061
          %v1064 = vrsqrt.pop %v1062
          %v1065 = vmul.f32 %v1049, %v1063
          %v1066 = vmul.f32 %v1050, %v1064
          %v1067 = vld [vmem:[#allocation14] sm:$0x1]
          %v1069 = vlaneseq
          %v1070 = vshrl.u32 %v1069, 7
          %v1071 = vsub.s32 0, %v1070
          %v1072 = vrot.slane %v1067, %v1071
          %v1074 = vmul.f32 %v1065, %v1072
          %v1075 = vmul.f32 %v1066, %v1072
          %v1076 = vld [vmem:[#allocation16] sm:$0x1]
          %v1078 = vlaneseq
          %v1079 = vshrl.u32 %v1078, 7
          %v1080 = vsub.s32 0, %v1079
          %v1081 = vrot.slane %v1076, %v1080
          %v1083 = vadd.f32 %v1074, %v1081
          %v1084 = vadd.f32 %v1075, %v1081
          %1085 = vst.msk [vmem:[%s951] sm:$0xff] %vm995, %v1083
          %1086 = vst.msk [vmem:[%s951 + $0x8] sm:$0xff] %vm995, %v1084
          %v1087 = vld [vmem:[#allocation17] sm:$0xf]
          %v1088 = vld [vmem:[#allocation17 + $0x4] sm:$0xf]
          %v1089 = vld [vmem:[#allocation17 + $0x8] sm:$0xf]
          %v1090 = vld [vmem:[#allocation17 + $0xc] sm:$0xf]
          %v1095 = vunpack.c.l.b16 %v1087
          %v1096 = vunpack.c.l.b16 %v1088
          %v1097 = vunpack.c.l.b16 %v1089
          %v1098 = vunpack.c.l.b16 %v1090
          %v1099 = vpack.c.b16 %v1096, %v1095
          %v1100 = vpack.c.b16 %v1098, %v1097
          %1103 = vmatprep.subr.bf16.mxu0 0
          %1104 = vmatpush1.bf16.msra.mxu0 0
          %1105 = vmatprep.subr.bf16.mxu0 0
          %1106 = vmatpush1.bf16.msra.mxu0 0
          %1107 = vmatprep.subr.bf16.mxu0 0
          %1108 = vmatpush1.bf16.msra.mxu0 0
          %1109 = vmatprep.subr.bf16.mxu0 0
          %1110 = vmatpush1.bf16.msra.mxu0 0
          %1111 = vmatprep.subr.bf16.mxu0 0
          %1112 = vmatpush1.bf16.msra.mxu0 0
          %1113 = vmatprep.subr.bf16.mxu0 0
          %1114 = vmatpush1.bf16.msra.mxu0 0
          %1115 = vmatprep.subr.bf16.mxu0 0
          %1116 = vmatpush1.bf16.msra.mxu0 %v1100
          %1117 = vmatprep.subr.bf16.mxu0 0
          %1118 = vmatpush1.bf16.msra.mxu0 %v1099
          %1119 = vmatprep.subr.bf16.mxu0 0
          %1120 = vmatpush2.bf16.msra.mxu0 0
          %1121 = vmatprep.subr.bf16.mxu0 0
          %1122 = vmatpush2.bf16.msra.mxu0 0
          %1123 = vmatprep.subr.bf16.mxu0 0
          %1124 = vmatpush2.bf16.msra.mxu0 0
          %1125 = vmatprep.subr.bf16.mxu0 0
          %1126 = vmatpush2.bf16.msra.mxu0 0
          %1127 = vmatprep.subr.bf16.mxu0 0
          %1128 = vmatpush2.bf16.msra.mxu0 0
          %1129 = vmatprep.subr.bf16.mxu0 0
          %1130 = vmatpush2.bf16.msra.mxu0 0
          %1131 = vmatprep.subr.bf16.mxu0 0
          %1132 = vmatpush2.bf16.msra.mxu0 0
          %1133 = vmatprep.subr.bf16.mxu0 0
          %1134 = vmatpush2.bf16.msra.mxu0 0
          %1135 = vmatprep.mubr.bf16.mxu0 0
          %1136 = vmatmul.mubr.bf16.gmra.mxu0 %v997
          %v1137 = vpop.f32.mrf.mxu0
          %v1138 = vadd.f32 0.0, %v1137
          %v1139 = vpop.f32.mrf.mxu0
          %v1140 = vpop.f32.mrf.mxu0
          %v1141 = vadd.f32 0.0, %v1140
          %v1142 = vpop.f32.mrf.mxu0
          %1143 = vdwg.mxu0
          %v1144 = vld [vmem:[#allocation26] sm:$0xff]
          %v1145 = vld [vmem:[#allocation26 + $0x8] sm:$0xff]
          %v1146 = vmul.f32 %v1138, %v1144
          %v1147 = vmul.f32 %v1141, %v1145
          %1150 = vrot.lane.b32.xlu0 %v1138, 112
          %v1151 = vpop.permute.xlu0 %1150
          %1152 = vrot.lane.b32.xlu0 %v1141, 112
          %v1153 = vpop.permute.xlu0 %1152
          %1156 = vrot.lane.b32.xlu0 %v1138, 16
          %v1157 = vpop.permute.xlu0 %1156
          %1158 = vrot.lane.b32.xlu0 %v1141, 16
          %v1159 = vpop.permute.xlu0 %1158
          %vm1162 = vcmask 130048
          %v1163 = vsel %vm1162, %v1151, %v1157
          %v1164 = vsel %vm1162, %v1153, %v1159
          %v1165 = vld [vmem:[#allocation25] sm:$0xff]
          %v1166 = vld [vmem:[#allocation25 + $0x8] sm:$0xff]
          %v1167 = vmul.f32 %v1163, %v1165
          %v1168 = vmul.f32 %v1164, %v1166
          %v1169 = vadd.f32 %v1146, %v1167
          %v1170 = vadd.f32 %v1147, %v1168
          %1171 = vst.msk [vmem:[%s958] sm:$0xff] %vm995, %v1169
          %1172 = vst.msk [vmem:[%s958 + $0x8] sm:$0xff] %vm995, %v1170
          %v1173 = vpack.c.bf16 %v1084, %v1083
          %v1174 = vld [vmem:[#allocation19] sm:$0xf]
          %v1175 = vld [vmem:[#allocation19 + $0x4] sm:$0xf]
          %v1176 = vld [vmem:[#allocation19 + $0x8] sm:$0xf]
          %v1177 = vld [vmem:[#allocation19 + $0xc] sm:$0xf]
          %v1178 = vld [vmem:[#allocation20] sm:$0x1]
          %v1180 = vlaneseq
          %v1181 = vshrl.u32 %v1180, 7
          %v1182 = vsub.s32 0, %v1181
          %v1183 = vrot.slane %v1178, %v1182
          %v1189 = vunpack.c.l.b16 %v1174
          %v1190 = vunpack.c.l.b16 %v1175
          %v1191 = vunpack.c.l.b16 %v1176
          %v1192 = vunpack.c.l.b16 %v1177
          %v1193 = vpack.c.b16 %v1190, %v1189
          %v1194 = vpack.c.b16 %v1192, %v1191
          %v1198 = vsel %vm995, %v1173, 0
          %1200 = vmatprep.subr.bf16.mxu0 0
          %1201 = vmatpush1.bf16.msra.mxu0 0
          %1202 = vmatprep.subr.bf16.mxu0 0
          %1203 = vmatpush1.bf16.msra.mxu0 0
          %1204 = vmatprep.subr.bf16.mxu0 0
          %1205 = vmatpush1.bf16.msra.mxu0 0
          %1206 = vmatprep.subr.bf16.mxu0 0
          %1207 = vmatpush1.bf16.msra.mxu0 0
          %1208 = vmatprep.subr.bf16.mxu0 0
          %1209 = vmatpush1.bf16.msra.mxu0 0
          %1210 = vmatprep.subr.bf16.mxu0 0
          %1211 = vmatpush1.bf16.msra.mxu0 0
          %1212 = vmatprep.subr.bf16.mxu0 0
          %1213 = vmatpush1.bf16.msra.mxu0 %v1194
          %1214 = vmatprep.subr.bf16.mxu0 0
          %1215 = vmatpush1.bf16.msra.mxu0 %v1193
          %1216 = vmatprep.subr.bf16.mxu0 0
          %1217 = vmatpush2.bf16.msra.mxu0 0
          %1218 = vmatprep.subr.bf16.mxu0 0
          %1219 = vmatpush2.bf16.msra.mxu0 0
          %1220 = vmatprep.subr.bf16.mxu0 0
          %1221 = vmatpush2.bf16.msra.mxu0 0
          %1222 = vmatprep.subr.bf16.mxu0 0
          %1223 = vmatpush2.bf16.msra.mxu0 0
          %1224 = vmatprep.subr.bf16.mxu0 0
          %1225 = vmatpush2.bf16.msra.mxu0 0
          %1226 = vmatprep.subr.bf16.mxu0 0
          %1227 = vmatpush2.bf16.msra.mxu0 0
          %1228 = vmatprep.subr.bf16.mxu0 0
          %1229 = vmatpush2.bf16.msra.mxu0 0
          %1230 = vmatprep.subr.bf16.mxu0 0
          %1231 = vmatpush2.bf16.msra.mxu0 0
          %1232 = vmatprep.mubr.bf16.mxu0 0
          %1233 = vmatmul.mubr.bf16.gmra.mxu0 %v1198
          %v1234 = vpop.f32.mrf.mxu0
          %v1235 = vadd.f32 %v1183, %v1234
          %v1236 = vpop.f32.mrf.mxu0
          %v1237 = vpop.f32.mrf.mxu0
          %v1238 = vadd.f32 %v1183, %v1237
          %v1239 = vpop.f32.mrf.mxu0
          %1240 = vdwg.mxu0
          %v1241 = vld [vmem:[#allocation29] sm:$0xff]
          %v1242 = vld [vmem:[#allocation29 + $0x8] sm:$0xff]
          %v1243 = vmul.f32 %v1235, %v1241
          %v1244 = vmul.f32 %v1238, %v1242
          %1247 = vrot.lane.b32.xlu0 %v1235, 112
          %v1248 = vpop.permute.xlu0 %1247
          %1249 = vrot.lane.b32.xlu0 %v1238, 112
          %v1250 = vpop.permute.xlu0 %1249
          %1253 = vrot.lane.b32.xlu0 %v1235, 16
          %v1254 = vpop.permute.xlu0 %1253
          %1255 = vrot.lane.b32.xlu0 %v1238, 16
          %v1256 = vpop.permute.xlu0 %1255
          %v1259 = vsel %vm1162, %v1248, %v1254
          %v1260 = vsel %vm1162, %v1250, %v1256
          %v1261 = vld [vmem:[#allocation28] sm:$0xff]
          %v1262 = vld [vmem:[#allocation28 + $0x8] sm:$0xff]
          %v1263 = vmul.f32 %v1259, %v1261
          %v1264 = vmul.f32 %v1260, %v1262
          %v1265 = vadd.f32 %v1243, %v1263
          %v1266 = vadd.f32 %v1244, %v1264
          %v1267 = vld [vmem:[%s9] sm:$0xf]
          %v1268 = vld [vmem:[%s9 + $0x4] sm:$0xf]
          %v1269 = vld [vmem:[%s9 + $0x8] sm:$0xf]
          %v1270 = vld [vmem:[%s9 + $0xc] sm:$0xf]
          %v1275 = vunpack.c.l.b16 %v1267
          %v1276 = vunpack.c.l.b16 %v1268
          %v1277 = vunpack.c.l.b16 %v1269
          %v1278 = vunpack.c.l.b16 %v1270
          %v1279 = vpack.c.b16 %v1276, %v1275
          %v1280 = vpack.c.b16 %v1278, %v1277
          %1283 = vmatprep.subr.bf16.mxu0 0
          %1284 = vmatpush1.bf16.msra.mxu0 0
          %1285 = vmatprep.subr.bf16.mxu0 0
          %1286 = vmatpush1.bf16.msra.mxu0 0
          %1287 = vmatprep.subr.bf16.mxu0 0
          %1288 = vmatpush1.bf16.msra.mxu0 0
          %1289 = vmatprep.subr.bf16.mxu0 0
          %1290 = vmatpush1.bf16.msra.mxu0 0
          %1291 = vmatprep.subr.bf16.mxu0 0
          %1292 = vmatpush1.bf16.msra.mxu0 0
          %1293 = vmatprep.subr.bf16.mxu0 0
          %1294 = vmatpush1.bf16.msra.mxu0 0
          %1295 = vmatprep.subr.bf16.mxu0 0
          %1296 = vmatpush1.bf16.msra.mxu0 %v1280
          %1297 = vmatprep.subr.bf16.mxu0 0
          %1298 = vmatpush1.bf16.msra.mxu0 %v1279
          %1299 = vmatprep.subr.bf16.mxu0 0
          %1300 = vmatpush2.bf16.msra.mxu0 0
          %1301 = vmatprep.subr.bf16.mxu0 0
          %1302 = vmatpush2.bf16.msra.mxu0 0
          %1303 = vmatprep.subr.bf16.mxu0 0
          %1304 = vmatpush2.bf16.msra.mxu0 0
          %1305 = vmatprep.subr.bf16.mxu0 0
          %1306 = vmatpush2.bf16.msra.mxu0 0
          %1307 = vmatprep.subr.bf16.mxu0 0
          %1308 = vmatpush2.bf16.msra.mxu0 0
          %1309 = vmatprep.subr.bf16.mxu0 0
          %1310 = vmatpush2.bf16.msra.mxu0 0
          %1311 = vmatprep.subr.bf16.mxu0 0
          %1312 = vmatpush2.bf16.msra.mxu0 0
          %1313 = vmatprep.subr.bf16.mxu0 0
          %1314 = vmatpush2.bf16.msra.mxu0 0
          %1315 = vmatprep.mubr.bf16.mxu0 0
          %1316 = vmatmul.mubr.bf16.gmra.mxu0 %v997
          %v1317 = vpop.f32.mrf.mxu0
          %v1318 = vadd.f32 0.0, %v1317
          %v1319 = vpop.f32.mrf.mxu0
          %v1320 = vpop.f32.mrf.mxu0
          %v1321 = vadd.f32 0.0, %v1320
          %v1322 = vpop.f32.mrf.mxu0
          %1323 = vdwg.mxu0
          %v1324 = vmul.f32 %v1318, 0.125
          %v1325 = vmul.f32 %v1321, 0.125
          %v1326 = vmul.f32 %v1265, 0.125
          %v1327 = vmul.f32 %v1266, 0.125
          %1330 = vrot.lane.b32.xlu0 %v1326, 32
          %v1331 = vpop.permute.xlu0 %1330
          %1332 = vrot.lane.b32.xlu0 %v1327, 32
          %v1333 = vpop.permute.xlu0 %1332
          %v1336 = vsel %vm995, %v1324, %v1331
          %v1337 = vsel %vm995, %v1325, %v1333
          %v1338 = vpack.c.bf16 %v1337, %v1336
          %v1340 = vunpack.c.l.b16 %v1338
          %v1341 = vunpack.c.h.b16 %v1338
          %v1342 = vpack.c.b16 %v1340, %v1340
          %v1343 = vpack.c.b16 %v1341, %v1341
          %vm1346 = vcmask 519168
          %1347 = vst.msk [vmem:[#allocation2] sm:$0xf] %vm1346, %v1342
          %1348 = vst.msk [vmem:[#allocation2 + $0x4] sm:$0xf] %vm1346, %v1343
          %vm1349 = vcmask 7168
          %1350 = vst.msk [vmem:[#allocation3] sm:$0xff] %vm1349, -1e+30
          %1351 = vst.msk [vmem:[#allocation3 + $0x8] sm:$0xff] %vm1349, -1e+30
          %1352 = vst.msk [vmem:[#allocation4] sm:$0xff] %vm1349, 0.0
          %1353 = vst.msk [vmem:[#allocation4 + $0x8] sm:$0xff] %vm1349, 0.0
          %1354 = vst.msk [vmem:[#allocation5] sm:$0xff] %vm995, 0.0
          %1355 = vst.msk [vmem:[#allocation5 + $0x8] sm:$0xff] %vm995, 0.0
        $region156: #{tpu_custom_call.1} parent=87 // pred_fallthru
          _
        %s1356 = smul.u32 %s59, 16
        %s1357 = smul.u32 %s58, 16
        %s1358 = sadd.s32 %s1357, 15
        %s1359 = sadd.s32 %s1358, %s971
        %p1360 = scmp.le.s32.totalorder %s1356, %s1359
        // Predicated region
        $region157: #{tpu_custom_call.1} parent=87 // pred_check
          %p1361 = pneg %p1360
        $region158: #{tpu_custom_call.1} parent=87 // pred_check_branch
          %1363 = sbr.rel (%p1361) target = $region160
        $region159: #{tpu_custom_call.1} parent=87 // pred_region
          %v1364 = vld [vmem:[%s833] sm:$0xff]
          %v1365 = vld [vmem:[%s833 + $0x8] sm:$0xff]
          %v1366 = vpack.c.bf16 %v1365, %v1364
          %v1367 = vld [vmem:[#allocation13] sm:$0xf]
          %v1368 = vld [vmem:[#allocation13 + $0x4] sm:$0xf]
          %v1369 = vld [vmem:[#allocation13 + $0x8] sm:$0xf]
          %v1370 = vld [vmem:[#allocation13 + $0xc] sm:$0xf]
          %v1375 = vunpack.c.l.b16 %v1367
          %v1376 = vunpack.c.l.b16 %v1368
          %v1377 = vunpack.c.l.b16 %v1369
          %v1378 = vunpack.c.l.b16 %v1370
          %v1379 = vpack.c.b16 %v1376, %v1375
          %v1380 = vpack.c.b16 %v1378, %v1377
          %vm1383 = vcmask 261120
          %v1385 = vsel %vm1383, %v1366, 0
          %1387 = vmatprep.subr.bf16.mxu0 0
          %1388 = vmatpush1.bf16.msra.mxu0 0
          %1389 = vmatprep.subr.bf16.mxu0 0
          %1390 = vmatpush1.bf16.msra.mxu0 0
          %1391 = vmatprep.subr.bf16.mxu0 0
          %1392 = vmatpush1.bf16.msra.mxu0 0
          %1393 = vmatprep.subr.bf16.mxu0 0
          %1394 = vmatpush1.bf16.msra.mxu0 0
          %1395 = vmatprep.subr.bf16.mxu0 0
          %1396 = vmatpush1.bf16.msra.mxu0 0
          %1397 = vmatprep.subr.bf16.mxu0 0
          %1398 = vmatpush1.bf16.msra.mxu0 0
          %1399 = vmatprep.subr.bf16.mxu0 0
          %1400 = vmatpush1.bf16.msra.mxu0 %v1380
          %1401 = vmatprep.subr.bf16.mxu0 0
          %1402 = vmatpush1.bf16.msra.mxu0 %v1379
          %1403 = vmatprep.subr.bf16.mxu0 0
          %1404 = vmatpush2.bf16.msra.mxu0 0
          %1405 = vmatprep.subr.bf16.mxu0 0
          %1406 = vmatpush2.bf16.msra.mxu0 0
          %1407 = vmatprep.subr.bf16.mxu0 0
          %1408 = vmatpush2.bf16.msra.mxu0 0
          %1409 = vmatprep.subr.bf16.mxu0 0
          %1410 = vmatpush2.bf16.msra.mxu0 0
          %1411 = vmatprep.subr.bf16.mxu0 0
          %1412 = vmatpush2.bf16.msra.mxu0 0
          %1413 = vmatprep.subr.bf16.mxu0 0
          %1414 = vmatpush2.bf16.msra.mxu0 0
          %1415 = vmatprep.subr.bf16.mxu0 0
          %1416 = vmatpush2.bf16.msra.mxu0 0
          %1417 = vmatprep.subr.bf16.mxu0 0
          %1418 = vmatpush2.bf16.msra.mxu0 0
          %1419 = vmatprep.mubr.bf16.mxu0 0
          %1420 = vmatmul.mubr.bf16.gmra.mxu0 %v1385
          %v1421 = vpop.f32.mrf.mxu0
          %v1422 = vadd.f32 0.0, %v1421
          %v1423 = vpop.f32.mrf.mxu0
          %v1424 = vpop.f32.mrf.mxu0
          %v1425 = vadd.f32 0.0, %v1424
          %v1426 = vpop.f32.mrf.mxu0
          %1427 = vdwg.mxu0
          %v1428 = vsel %vm1383, %v1422, 0.0
          %1429 = vadd.xlane.f32.xlu0 %v1428
          %v1430 = vpop.xlane.xlu0 %1429
          %v1431 = vsel %vm1383, %v1425, 0.0
          %1432 = vadd.xlane.f32.xlu0 %v1431
          %v1433 = vpop.xlane.xlu0 %1432
          %v1434 = vrcp.pop 32.0
          %v1435 = vmul.f32 %v1430, %v1434
          %v1436 = vmul.f32 %v1433, %v1434
          %v1437 = vsub.f32 %v1422, %v1435
          %v1438 = vsub.f32 %v1425, %v1436
          %v1439 = vmul.f32 %v1437, %v1437
          %v1440 = vmul.f32 %v1438, %v1438
          %v1441 = vsel %vm1383, %v1439, 0.0
          %1442 = vadd.xlane.f32.xlu0 %v1441
          %v1443 = vpop.xlane.xlu0 %1442
          %v1444 = vsel %vm1383, %v1440, 0.0
          %1445 = vadd.xlane.f32.xlu0 %v1444
          %v1446 = vpop.xlane.xlu0 %1445
          %v1447 = vmul.f32 %v1443, %v1434
          %v1448 = vmul.f32 %v1446, %v1434
          %v1449 = vadd.f32 %v1447, 1e-05
          %v1450 = vadd.f32 %v1448, 1e-05
          %v1451 = vrsqrt.pop %v1449
          %v1452 = vrsqrt.pop %v1450
          %v1453 = vmul.f32 %v1437, %v1451
          %v1454 = vmul.f32 %v1438, %v1452
          %v1455 = vld [vmem:[#allocation14] sm:$0x1]
          %v1457 = vlaneseq
          %v1458 = vshrl.u32 %v1457, 7
          %v1459 = vsub.s32 0, %v1458
          %v1460 = vrot.slane %v1455, %v1459
          %v1462 = vmul.f32 %v1453, %v1460
          %v1463 = vmul.f32 %v1454, %v1460
          %v1464 = vld [vmem:[#allocation16] sm:$0x1]
          %v1466 = vlaneseq
          %v1467 = vshrl.u32 %v1466, 7
          %v1468 = vsub.s32 0, %v1467
          %v1469 = vrot.slane %v1464, %v1468
          %v1471 = vadd.f32 %v1462, %v1469
          %v1472 = vadd.f32 %v1463, %v1469
          %v1473 = vld [vmem:[#allocation17] sm:$0xf]
          %v1474 = vld [vmem:[#allocation17 + $0x4] sm:$0xf]
          %v1475 = vld [vmem:[#allocation17 + $0x8] sm:$0xf]
          %v1476 = vld [vmem:[#allocation17 + $0xc] sm:$0xf]
          %v1481 = vunpack.c.l.b16 %v1473
          %v1482 = vunpack.c.l.b16 %v1474
          %v1483 = vunpack.c.l.b16 %v1475
          %v1484 = vunpack.c.l.b16 %v1476
          %v1485 = vpack.c.b16 %v1482, %v1481
          %v1486 = vpack.c.b16 %v1484, %v1483
          %1489 = vmatprep.subr.bf16.mxu0 0
          %1490 = vmatpush1.bf16.msra.mxu0 0
          %1491 = vmatprep.subr.bf16.mxu0 0
          %1492 = vmatpush1.bf16.msra.mxu0 0
          %1493 = vmatprep.subr.bf16.mxu0 0
          %1494 = vmatpush1.bf16.msra.mxu0 0
          %1495 = vmatprep.subr.bf16.mxu0 0
          %1496 = vmatpush1.bf16.msra.mxu0 0
          %1497 = vmatprep.subr.bf16.mxu0 0
          %1498 = vmatpush1.bf16.msra.mxu0 0
          %1499 = vmatprep.subr.bf16.mxu0 0
          %1500 = vmatpush1.bf16.msra.mxu0 0
          %1501 = vmatprep.subr.bf16.mxu0 0
          %1502 = vmatpush1.bf16.msra.mxu0 %v1486
          %1503 = vmatprep.subr.bf16.mxu0 0
          %1504 = vmatpush1.bf16.msra.mxu0 %v1485
          %1505 = vmatprep.subr.bf16.mxu0 0
          %1506 = vmatpush2.bf16.msra.mxu0 0
          %1507 = vmatprep.subr.bf16.mxu0 0
          %1508 = vmatpush2.bf16.msra.mxu0 0
          %1509 = vmatprep.subr.bf16.mxu0 0
          %1510 = vmatpush2.bf16.msra.mxu0 0
          %1511 = vmatprep.subr.bf16.mxu0 0
          %1512 = vmatpush2.bf16.msra.mxu0 0
          %1513 = vmatprep.subr.bf16.mxu0 0
          %1514 = vmatpush2.bf16.msra.mxu0 0
          %1515 = vmatprep.subr.bf16.mxu0 0
          %1516 = vmatpush2.bf16.msra.mxu0 0
          %1517 = vmatprep.subr.bf16.mxu0 0
          %1518 = vmatpush2.bf16.msra.mxu0 0
          %1519 = vmatprep.subr.bf16.mxu0 0
          %1520 = vmatpush2.bf16.msra.mxu0 0
          %1521 = vmatprep.mubr.bf16.mxu0 0
          %1522 = vmatmul.mubr.bf16.gmra.mxu0 %v1385
          %v1523 = vpop.f32.mrf.mxu0
          %v1524 = vadd.f32 0.0, %v1523
          %v1525 = vpop.f32.mrf.mxu0
          %v1526 = vpop.f32.mrf.mxu0
          %v1527 = vadd.f32 0.0, %v1526
          %v1528 = vpop.f32.mrf.mxu0
          %1529 = vdwg.mxu0
          %v1530 = vld [vmem:[#allocation32] sm:$0xff]
          %v1531 = vld [vmem:[#allocation32 + $0x8] sm:$0xff]
          %v1532 = vmul.f32 %v1524, %v1530
          %v1533 = vmul.f32 %v1527, %v1531
          %1536 = vrot.lane.b32.xlu0 %v1524, 112
          %v1537 = vpop.permute.xlu0 %1536
          %1538 = vrot.lane.b32.xlu0 %v1527, 112
          %v1539 = vpop.permute.xlu0 %1538
          %1542 = vrot.lane.b32.xlu0 %v1524, 16
          %v1543 = vpop.permute.xlu0 %1542
          %1544 = vrot.lane.b32.xlu0 %v1527, 16
          %v1545 = vpop.permute.xlu0 %1544
          %vm1548 = vcmask 130048
          %v1549 = vsel %vm1548, %v1537, %v1543
          %v1550 = vsel %vm1548, %v1539, %v1545
          %v1551 = vld [vmem:[#allocation31] sm:$0xff]
          %v1552 = vld [vmem:[#allocation31 + $0x8] sm:$0xff]
          %v1553 = vmul.f32 %v1549, %v1551
          %v1554 = vmul.f32 %v1550, %v1552
          %v1555 = vadd.f32 %v1532, %v1553
          %v1556 = vadd.f32 %v1533, %v1554
          %1559 = vrot.lane.b32.xlu0 %v1555, 32
          %v1560 = vpop.permute.xlu0 %1559
          %1561 = vrot.lane.b32.xlu0 %v1556, 32
          %v1562 = vpop.permute.xlu0 %1561
          %v1565 = vsel %vm1383, %v1471, %v1560
          %v1566 = vsel %vm1383, %v1472, %v1562
          %v1567 = vpack.c.bf16 %v1566, %v1565
          %v1568 = vld [vmem:[#allocation2] sm:$0xf]
          %v1569 = vld [vmem:[#allocation2 + $0x4] sm:$0xf]
          %v1572 = vunpack.c.l.b16 %v1568
          %v1573 = vunpack.c.l.b16 %v1569
          %v1574 = vpack.c.b16 %v1573, %v1572
          %vm1575 = vcmask 523264
          %v1577 = vsel %vm1575, %v1574, 0
          %v1580 = vsel %vm1575, %v1567, 0
          %1582 = vmatprep.subr.bf16.mxu0 0
          %1583 = vmatpush1.bf16.xpose.msra.mxu0 0
          %1584 = vmatprep.subr.bf16.mxu0 0
          %1585 = vmatpush1.bf16.xpose.msra.mxu0 0
          %1586 = vmatprep.subr.bf16.mxu0 0
          %1587 = vmatpush1.bf16.xpose.msra.mxu0 0
          %1588 = vmatprep.subr.bf16.mxu0 0
          %1589 = vmatpush1.bf16.xpose.msra.mxu0 0
          %1590 = vmatprep.subr.bf16.mxu0 0
          %1591 = vmatpush1.bf16.xpose.msra.mxu0 0
          %1592 = vmatprep.subr.bf16.mxu0 0
          %1593 = vmatpush1.bf16.xpose.msra.mxu0 0
          %1594 = vmatprep.subr.bf16.mxu0 0
          %1595 = vmatpush1.bf16.xpose.msra.mxu0 0
          %1596 = vmatprep.subr.bf16.mxu0 0
          %1597 = vmatpush1.bf16.xpose.msra.mxu0 %v1580
          %1598 = vmatprep.subr.bf16.mxu0 0
          %1599 = vmatpush2.bf16.xpose.msra.mxu0 0
          %1600 = vmatprep.subr.bf16.mxu0 0
          %1601 = vmatpush2.bf16.xpose.msra.mxu0 0
          %1602 = vmatprep.subr.bf16.mxu0 0
          %1603 = vmatpush2.bf16.xpose.msra.mxu0 0
          %1604 = vmatprep.subr.bf16.mxu0 0
          %1605 = vmatpush2.bf16.xpose.msra.mxu0 0
          %1606 = vmatprep.subr.bf16.mxu0 0
          %1607 = vmatpush2.bf16.xpose.msra.mxu0 0
          %1608 = vmatprep.subr.bf16.mxu0 0
          %1609 = vmatpush2.bf16.xpose.msra.mxu0 0
          %1610 = vmatprep.subr.bf16.mxu0 0
          %1611 = vmatpush2.bf16.xpose.msra.mxu0 0
          %1612 = vmatprep.subr.bf16.mxu0 0
          %1613 = vmatpush2.bf16.xpose.msra.mxu0 0
          %1614 = vmatprep.mubr.bf16.mxu0 0
          %1615 = vmatmul.mubr.bf16.gmra.mxu0 %v1577
          %v1616 = vpop.f32.mrf.mxu0
          %v1617 = vadd.f32 0.0, %v1616
          %v1618 = vpop.f32.mrf.mxu0
          %v1619 = vpop.f32.mrf.mxu0
          %v1620 = vadd.f32 0.0, %v1619
          %v1621 = vpop.f32.mrf.mxu0
          %1622 = vdwg.mxu0
          %v1623 = vlaneseq
          %v1624 = vshrl.u32 %v1623, 7
          %v1625 = vadd.s32 %v1624, 8
          %v1626 = vstv %s1357
          %v1627 = vadd.s32 %v1626, %v1624
          %v1628 = vadd.s32 %v1626, %v1625
          %v1629 = vlaneseq
          %v1630 = vand.u32 %v1629, 127
          %v1631 = vstv %s1356
          %v1632 = vadd.s32 %v1631, %v1630
          %v1633 = vstv %s971
          %v1634 = vadd.s32 %v1627, %v1633
          %v1635 = vadd.s32 %v1628, %v1633
          %vm1636 = vcmp.le.s32.totalorder %v1632, %v1634
          %vm1637 = vcmp.le.s32.totalorder %v1632, %v1635
          %v1638 = vsel %vm1636, %v1617, -1e+30
          %v1639 = vsel %vm1637, %v1620, -1e+30
          %v1640 = vld [vmem:[#allocation3] sm:$0xff]
          %v1641 = vld [vmem:[#allocation3 + $0x8] sm:$0xff]
          %v1642 = vsel %vm1548, %v1638, -inf
          %1643 = vmax.xlane.f32.xlu0 %v1642
          %v1644 = vpop.xlane.xlu0 %1643
          %v1645 = vsel %vm1548, %v1639, -inf
          %1646 = vmax.xlane.f32.xlu0 %v1645
          %v1647 = vpop.xlane.xlu0 %1646
          %v1648 = vmax.f32 %v1640, %v1644
          %v1649 = vmax.f32 %v1641, %v1647
          %v1650 = vsub.f32 %v1640, %v1648
          %v1651 = vsub.f32 %v1641, %v1649
          %v1652 = vmul.f32 %v1650, 1.442695
          %v1653 = vpow.pop %v1652
          %v1654 = vmul.f32 %v1651, 1.442695
          %v1655 = vpow.pop %v1654
          %1657 = vset.pattern.permute.xlu0 0
          %1658 = vperm.xlu0 %1657, %v1648
          %v1659 = vpop.permute.xlu0 %1658
          %1662 = vset.pattern.permute.xlu0 0
          %1663 = vperm.xlu0 %1662, %v1649
          %v1664 = vpop.permute.xlu0 %1663
          %v1666 = vsub.f32 %v1638, %v1659
          %v1667 = vsub.f32 %v1639, %v1664
          %v1668 = vmul.f32 %v1666, 1.442695
          %v1669 = vpow.pop %v1668
          %v1670 = vmul.f32 %v1667, 1.442695
          %v1671 = vpow.pop %v1670
          %v1672 = vld [vmem:[#allocation4] sm:$0xff]
          %v1673 = vld [vmem:[#allocation4 + $0x8] sm:$0xff]
          %v1674 = vmul.f32 %v1653, %v1672
          %v1675 = vmul.f32 %v1655, %v1673
          %v1676 = vsel %vm1548, %v1669, 0.0
          %1677 = vadd.xlane.f32.xlu0 %v1676
          %v1678 = vpop.xlane.xlu0 %1677
          %v1679 = vsel %vm1548, %v1671, 0.0
          %1680 = vadd.xlane.f32.xlu0 %v1679
          %v1681 = vpop.xlane.xlu0 %1680
          %v1682 = vadd.f32 %v1674, %v1678
          %v1683 = vadd.f32 %v1675, %v1681
          %vm1684 = vcmask 7168
          %1685 = vst.msk [vmem:[#allocation4] sm:$0xff] %vm1684, %v1682
          %1686 = vst.msk [vmem:[#allocation4 + $0x8] sm:$0xff] %vm1684, %v1683
          %v1687 = vpack.c.bf16 %v1472, %v1471
          %v1688 = vld [vmem:[#allocation22] sm:$0xf]
          %v1689 = vld [vmem:[#allocation22 + $0x4] sm:$0xf]
          %v1690 = vld [vmem:[#allocation22 + $0x8] sm:$0xf]
          %v1691 = vld [vmem:[#allocation22 + $0xc] sm:$0xf]
          %v1696 = vunpack.c.l.b16 %v1688
          %v1697 = vunpack.c.l.b16 %v1689
          %v1698 = vunpack.c.l.b16 %v1690
          %v1699 = vunpack.c.l.b16 %v1691
          %v1700 = vpack.c.b16 %v1697, %v1696
          %v1701 = vpack.c.b16 %v1699, %v1698
          %v1705 = vsel %vm1383, %v1687, 0
          %1707 = vmatprep.subr.bf16.mxu0 0
          %1708 = vmatpush1.bf16.msra.mxu0 0
          %1709 = vmatprep.subr.bf16.mxu0 0
          %1710 = vmatpush1.bf16.msra.mxu0 0
          %1711 = vmatprep.subr.bf16.mxu0 0
          %1712 = vmatpush1.bf16.msra.mxu0 0
          %1713 = vmatprep.subr.bf16.mxu0 0
          %1714 = vmatpush1.bf16.msra.mxu0 0
          %1715 = vmatprep.subr.bf16.mxu0 0
          %1716 = vmatpush1.bf16.msra.mxu0 0
          %1717 = vmatprep.subr.bf16.mxu0 0
          %1718 = vmatpush1.bf16.msra.mxu0 0
          %1719 = vmatprep.subr.bf16.mxu0 0
          %1720 = vmatpush1.bf16.msra.mxu0 %v1701
          %1721 = vmatprep.subr.bf16.mxu0 0
          %1722 = vmatpush1.bf16.msra.mxu0 %v1700
          %1723 = vmatprep.subr.bf16.mxu0 0
          %1724 = vmatpush2.bf16.msra.mxu0 0
          %1725 = vmatprep.subr.bf16.mxu0 0
          %1726 = vmatpush2.bf16.msra.mxu0 0
          %1727 = vmatprep.subr.bf16.mxu0 0
          %1728 = vmatpush2.bf16.msra.mxu0 0
          %1729 = vmatprep.subr.bf16.mxu0 0
          %1730 = vmatpush2.bf16.msra.mxu0 0
          %1731 = vmatprep.subr.bf16.mxu0 0
          %1732 = vmatpush2.bf16.msra.mxu0 0
          %1733 = vmatprep.subr.bf16.mxu0 0
          %1734 = vmatpush2.bf16.msra.mxu0 0
          %1735 = vmatprep.subr.bf16.mxu0 0
          %1736 = vmatpush2.bf16.msra.mxu0 0
          %1737 = vmatprep.subr.bf16.mxu0 0
          %1738 = vmatpush2.bf16.msra.mxu0 0
          %1739 = vmatprep.mubr.bf16.mxu0 0
          %1740 = vmatmul.mubr.bf16.gmra.mxu0 %v1705
          %v1741 = vpop.f32.mrf.mxu0
          %v1742 = vadd.f32 0.0, %v1741
          %v1743 = vpop.f32.mrf.mxu0
          %v1744 = vpop.f32.mrf.mxu0
          %v1745 = vadd.f32 0.0, %v1744
          %v1746 = vpop.f32.mrf.mxu0
          %1747 = vdwg.mxu0
          %v1748 = vld [vmem:[#allocation5] sm:$0xff]
          %v1749 = vld [vmem:[#allocation5 + $0x8] sm:$0xff]
          %1751 = vset.pattern.permute.xlu0 0
          %1752 = vperm.xlu0 %1751, %v1653
          %v1753 = vpop.permute.xlu0 %1752
          %1756 = vset.pattern.permute.xlu0 0
          %1757 = vperm.xlu0 %1756, %v1655
          %v1758 = vpop.permute.xlu0 %1757
          %v1760 = vmul.f32 %v1753, %v1748
          %v1761 = vmul.f32 %v1758, %v1749
          %v1762 = vpack.c.bf16 %v1671, %v1669
          %v1763 = vpack.c.bf16 %v1745, %v1742
          %v1765 = vsel %vm1548, %v1762, 0
          %1767 = vmatprep.subr.bf16.mxu0 0
          %1768 = vmatpush1.bf16.msra.mxu0 0
          %1769 = vmatprep.subr.bf16.mxu0 0
          %1770 = vmatpush1.bf16.msra.mxu0 0
          %1771 = vmatprep.subr.bf16.mxu0 0
          %1772 = vmatpush1.bf16.msra.mxu0 0
          %1773 = vmatprep.subr.bf16.mxu0 0
          %1774 = vmatpush1.bf16.msra.mxu0 0
          %1775 = vmatprep.subr.bf16.mxu0 0
          %1776 = vmatpush1.bf16.msra.mxu0 0
          %1777 = vmatprep.subr.bf16.mxu0 0
          %1778 = vmatpush1.bf16.msra.mxu0 0
          %1779 = vmatprep.subr.bf16.mxu0 0
          %1780 = vmatpush1.bf16.msra.mxu0 0
          %1781 = vmatprep.subr.bf16.mxu0 0
          %1782 = vmatpush1.bf16.msra.mxu0 %v1763
          %1783 = vmatprep.subr.bf16.mxu0 0
          %1784 = vmatpush2.bf16.msra.mxu0 0
          %1785 = vmatprep.subr.bf16.mxu0 0
          %1786 = vmatpush2.bf16.msra.mxu0 0
          %1787 = vmatprep.subr.bf16.mxu0 0
          %1788 = vmatpush2.bf16.msra.mxu0 0
          %1789 = vmatprep.subr.bf16.mxu0 0
          %1790 = vmatpush2.bf16.msra.mxu0 0
          %1791 = vmatprep.subr.bf16.mxu0 0
          %1792 = vmatpush2.bf16.msra.mxu0 0
          %1793 = vmatprep.subr.bf16.mxu0 0
          %1794 = vmatpush2.bf16.msra.mxu0 0
          %1795 = vmatprep.subr.bf16.mxu0 0
          %1796 = vmatpush2.bf16.msra.mxu0 0
          %1797 = vmatprep.subr.bf16.mxu0 0
          %1798 = vmatpush2.bf16.msra.mxu0 0
          %1799 = vmatprep.mubr.bf16.mxu0 0
          %1800 = vmatmul.mubr.bf16.gmra.mxu0 %v1765
          %v1801 = vpop.f32.mrf.mxu0
          %v1802 = vadd.f32 0.0, %v1801
          %v1803 = vpop.f32.mrf.mxu0
          %v1804 = vpop.f32.mrf.mxu0
          %v1805 = vadd.f32 0.0, %v1804
          %v1806 = vpop.f32.mrf.mxu0
          %1807 = vdwg.mxu0
          %v1808 = vadd.f32 %v1760, %v1802
          %v1809 = vadd.f32 %v1761, %v1805
          %1810 = vst.msk [vmem:[#allocation5] sm:$0xff] %vm1383, %v1808
          %1811 = vst.msk [vmem:[#allocation5 + $0x8] sm:$0xff] %vm1383, %v1809
          %1812 = vst.msk [vmem:[#allocation3] sm:$0xff] %vm1684, %v1648
          %1813 = vst.msk [vmem:[#allocation3 + $0x8] sm:$0xff] %vm1684, %v1649
        $region160: #{tpu_custom_call.1} parent=87 // pred_fallthru
          _
        // Predicated region
        $region161: #{tpu_custom_call.1} parent=87 // pred_check
          %p1814 = pneg %p972
        $region162: #{tpu_custom_call.1} parent=87 // pred_check_branch
          %1816 = sbr.rel (%p1814) target = $region164
        $region163: #{tpu_custom_call.1} parent=87 // pred_region
          %v1817 = vld [vmem:[#allocation4] sm:$0xff]
          %v1818 = vld [vmem:[#allocation4 + $0x8] sm:$0xff]
          %v1819 = vrcp.pop %v1817
          %v1820 = vrcp.pop %v1818
          %v1821 = vld [vmem:[#allocation5] sm:$0xff]
          %v1822 = vld [vmem:[#allocation5 + $0x8] sm:$0xff]
          %1824 = vset.pattern.permute.xlu0 0
          %1825 = vperm.xlu0 %1824, %v1819
          %v1826 = vpop.permute.xlu0 %1825
          %1829 = vset.pattern.permute.xlu0 0
          %1830 = vperm.xlu0 %1829, %v1820
          %v1831 = vpop.permute.xlu0 %1830
          %v1833 = vmul.f32 %v1821, %v1826
          %v1834 = vmul.f32 %v1822, %v1831
          %v1835 = vpack.c.bf16 %v1834, %v1833
          %v1836 = vld [vmem:[#allocation23] sm:$0xf]
          %v1837 = vld [vmem:[#allocation23 + $0x4] sm:$0xf]
          %v1838 = vld [vmem:[#allocation23 + $0x8] sm:$0xf]
          %v1839 = vld [vmem:[#allocation23 + $0xc] sm:$0xf]
          %v1844 = vunpack.c.l.b16 %v1836
          %v1845 = vunpack.c.l.b16 %v1837
          %v1846 = vunpack.c.l.b16 %v1838
          %v1847 = vunpack.c.l.b16 %v1839
          %v1848 = vpack.c.b16 %v1845, %v1844
          %v1849 = vpack.c.b16 %v1847, %v1846
          %vm1852 = vcmask 261120
          %v1854 = vsel %vm1852, %v1835, 0
          %1856 = vmatprep.subr.bf16.mxu0 0
          %1857 = vmatpush1.bf16.msra.mxu0 0
          %1858 = vmatprep.subr.bf16.mxu0 0
          %1859 = vmatpush1.bf16.msra.mxu0 0
          %1860 = vmatprep.subr.bf16.mxu0 0
          %1861 = vmatpush1.bf16.msra.mxu0 0
          %1862 = vmatprep.subr.bf16.mxu0 0
          %1863 = vmatpush1.bf16.msra.mxu0 0
          %1864 = vmatprep.subr.bf16.mxu0 0
          %1865 = vmatpush1.bf16.msra.mxu0 0
          %1866 = vmatprep.subr.bf16.mxu0 0
          %1867 = vmatpush1.bf16.msra.mxu0 0
          %1868 = vmatprep.subr.bf16.mxu0 0
          %1869 = vmatpush1.bf16.msra.mxu0 %v1849
          %1870 = vmatprep.subr.bf16.mxu0 0
          %1871 = vmatpush1.bf16.msra.mxu0 %v1848
          %1872 = vmatprep.subr.bf16.mxu0 0
          %1873 = vmatpush2.bf16.msra.mxu0 0
          %1874 = vmatprep.subr.bf16.mxu0 0
          %1875 = vmatpush2.bf16.msra.mxu0 0
          %1876 = vmatprep.subr.bf16.mxu0 0
          %1877 = vmatpush2.bf16.msra.mxu0 0
          %1878 = vmatprep.subr.bf16.mxu0 0
          %1879 = vmatpush2.bf16.msra.mxu0 0
          %1880 = vmatprep.subr.bf16.mxu0 0
          %1881 = vmatpush2.bf16.msra.mxu0 0
          %1882 = vmatprep.subr.bf16.mxu0 0
          %1883 = vmatpush2.bf16.msra.mxu0 0
          %1884 = vmatprep.subr.bf16.mxu0 0
          %1885 = vmatpush2.bf16.msra.mxu0 0
          %1886 = vmatprep.subr.bf16.mxu0 0
          %1887 = vmatpush2.bf16.msra.mxu0 0
          %1888 = vmatprep.mubr.bf16.mxu0 0
          %1889 = vmatmul.mubr.bf16.gmra.mxu0 %v1854
          %v1890 = vpop.f32.mrf.mxu0
          %v1891 = vadd.f32 0.0, %v1890
          %v1892 = vpop.f32.mrf.mxu0
          %v1893 = vpop.f32.mrf.mxu0
          %v1894 = vadd.f32 0.0, %v1893
          %v1895 = vpop.f32.mrf.mxu0
          %1896 = vdwg.mxu0
          %1897 = vst.msk [vmem:[%s944] sm:$0xff] %vm1852, %v1891
          %1898 = vst.msk [vmem:[%s944 + $0x8] sm:$0xff] %vm1852, %v1894
        $region164: #{tpu_custom_call.1} parent=87 // pred_fallthru
          _
        %s1899 = sand.u32 %s482, 1
        %s1900 = scalar_lea.sflag [#allocation10], %s1899
        %s1901 = sand.u32 %s482, 1
        %s1902 = smul.addr %s1901, 16
        %s1903 = scalar_lea.vmem [#allocation34], %s1902
        %s1904 = sand.u32 %s52, 1
        %s1905 = scalar_lea.sflag [#allocation36], %s1904
        %s1906 = sand.u32 %s510, 1
        %s1907 = smul.addr %s1906, 16
        %s1908 = scalar_lea.vmem [#allocation35], %s1907
        %s1909 = sand.u32 %s52, 1
        %s1910 = scalar_lea.sflag [#allocation36], %s1909
        %s1911 = sand.u32 %s538, 1
        %s1912 = smul.addr %s1911, 16
        %s1913 = scalar_lea.vmem [#allocation37], %s1912
        // Predicated region
        $region165: #{tpu_custom_call.1} parent=87 // pred_check
          %p1914 = pneg %p492
        $region166: #{tpu_custom_call.1} parent=87 // pred_check_branch
          %1916 = sbr.rel (%p1914) target = $region168
        $region167: #{tpu_custom_call.1} parent=87 // pred_region
          %s1917 = smul.u32 2, %s58
          %s1919 = ssub.s32 256, 256
          %1920 = vsyncadd %s1900, %s1919
          %s1921 = smul.addr %s57, 2
          %s1922 = sadd.s32 %s1917, %s1921
          %s1923 = smul.addr %s1922, 128
          %s1924 = scalar_lea.hbm %s18, %s1923
          %s1925 = sshll.u32 %s1903, 4
          %s1926 = int_to_ptr.vmem [resolvable:$true] %s1925
          %1931 = dma.vmem_to_hbm [thread:$0]  %s1926, 256, %s1924, %s1900, 128, 128, 8
        $region168: #{tpu_custom_call.1} parent=87 // pred_fallthru
          _
        // Predicated region
        $region169: #{tpu_custom_call.1} parent=87 // pred_check
          %p1932 = pneg %p520
        $region170: #{tpu_custom_call.1} parent=87 // pred_check_branch
          %1934 = sbr.rel (%p1932) target = $region172
        $region171: #{tpu_custom_call.1} parent=87 // pred_region
          %s1935 = smul.u32 2, %s58
          %s1937 = ssub.s32 256, 256
          %1938 = vsyncadd %s1905, %s1937
          %s1939 = smul.addr %s57, 2
          %s1940 = sadd.s32 %s1935, %s1939
          %s1941 = smul.addr %s1940, 128
          %s1942 = scalar_lea.hbm %s19, %s1941
          %s1943 = sshll.u32 %s1908, 4
          %s1944 = int_to_ptr.vmem [resolvable:$true] %s1943
          %1949 = dma.vmem_to_hbm [thread:$0]  %s1944, 256, %s1942, %s1905, 128, 128, 8
        $region172: #{tpu_custom_call.1} parent=87 // pred_fallthru
          _
        // Predicated region
        $region173: #{tpu_custom_call.1} parent=87 // pred_check
          %p1950 = pneg %p548
        $region174: #{tpu_custom_call.1} parent=87 // pred_check_branch
          %1952 = sbr.rel (%p1950) target = $region176
        $region175: #{tpu_custom_call.1} parent=87 // pred_region
          %s1953 = smul.u32 2, %s58
          %s1955 = ssub.s32 256, 256
          %1956 = vsyncadd %s1910, %s1955
          %s1957 = smul.addr %s57, 2
          %s1958 = sadd.s32 %s1953, %s1957
          %s1959 = smul.addr %s1958, 128
          %s1960 = scalar_lea.hbm %s20, %s1959
          %s1961 = sshll.u32 %s1913, 4
          %s1962 = int_to_ptr.vmem [resolvable:$true] %s1961
          %1967 = dma.vmem_to_hbm [thread:$0]  %s1962, 256, %s1960, %s1910, 128, 128, 8
        $region176: #{tpu_custom_call.1} parent=87 // pred_fallthru
          _
      $region88: #{tpu_custom_call.1} parent=5 // pred_fallthru
        _
      %p1968 = scmp.le.s32.totalorder 2, %s47
      // Predicated region
      $region177: #{tpu_custom_call.1} parent=5 // pred_check
        %p1969 = pneg %p1968
      $region178: #{tpu_custom_call.1} parent=5 // pred_check_branch
        %1971 = sbr.rel (%p1969) target = $region180
      $region179: #{tpu_custom_call.1} parent=5 // pred_region
        %s1972 = ssub.s32 %s47, 2
        // Predicated region
        $region181: #{tpu_custom_call.1} parent=179 // pred_check
          %p1973 = pneg %p498
        $region182: #{tpu_custom_call.1} parent=179 // pred_check_branch
          %1975 = sbr.rel (%p1973) target = $region184
        $region183: #{tpu_custom_call.1} parent=179 // pred_region
          %s1976 = sand.u32 %s483, 1
          %s1977 = scalar_lea.sflag [#allocation10], %s1976
          %s1978 = sand.u32 %s483, 1
          %s1979 = smul.addr %s1978, 16
          %s1980 = scalar_lea.vmem [#allocation34], %s1979
          %1981 = dma.done %s1977, 256
        $region184: #{tpu_custom_call.1} parent=179 // pred_fallthru
          _
        // Predicated region
        $region185: #{tpu_custom_call.1} parent=179 // pred_check
          %p1982 = pneg %p526
        $region186: #{tpu_custom_call.1} parent=179 // pred_check_branch
          %1984 = sbr.rel (%p1982) target = $region188
        $region187: #{tpu_custom_call.1} parent=179 // pred_region
          %s1985 = sand.u32 %s53, 1
          %s1986 = scalar_lea.sflag [#allocation36], %s1985
          %s1987 = sand.u32 %s511, 1
          %s1988 = smul.addr %s1987, 16
          %s1989 = scalar_lea.vmem [#allocation35], %s1988
          %1990 = dma.done %s1986, 256
        $region188: #{tpu_custom_call.1} parent=179 // pred_fallthru
          _
        // Predicated region
        $region189: #{tpu_custom_call.1} parent=179 // pred_check
          %p1991 = pneg %p554
        $region190: #{tpu_custom_call.1} parent=179 // pred_check_branch
          %1993 = sbr.rel (%p1991) target = $region192
        $region191: #{tpu_custom_call.1} parent=179 // pred_region
          %s1994 = sand.u32 %s53, 1
          %s1995 = scalar_lea.sflag [#allocation36], %s1994
          %s1996 = sand.u32 %s539, 1
          %s1997 = smul.addr %s1996, 16
          %s1998 = scalar_lea.vmem [#allocation37], %s1997
          %1999 = dma.done %s1995, 256
        $region192: #{tpu_custom_call.1} parent=179 // pred_fallthru
          _
      $region180: #{tpu_custom_call.1} parent=5 // pred_fallthru
        _
    $region6: #{tpu_custom_call.1} parent=1 // loop_footer
      %s51 = sadd.s32 1, %s47
    $region7: #{tpu_custom_call.1} parent=1 // loop_footer_branch
      %46 = sbr.rel target = $region3
    $region8: #{tpu_custom_call.1} parent=1 // loop_exit
      _
    %2000 = vsyncpa [#allocation9], 1
    %s2001 = scalar_lea.sflag [#allocation9], 1
    %2002 = vsyncpa %s2001, 1
    %2003 = vsyncpa [#allocation12], 1
    %s2004 = scalar_lea.sflag [#allocation12], 1
    %2005 = vsyncpa %s2004, 1
    %2006 = vsyncpa [#allocation15], 1
    %2007 = vsyncpa [#allocation18], 1
    %2008 = vsyncpa [#allocation21], 1
    %2009 = vsyncpa [#allocation24], 1
    %2010 = vsyncpa [#allocation27], 1
    %2011 = vsyncpa [#allocation30], 1
    %2012 = vsyncpa [#allocation33], 1
    %2013 = vsyncpa [#allocation10], 1
    %s2014 = scalar_lea.sflag [#allocation10], 1
    %2015 = vsyncpa %s2014, 1
    %2016 = vsyncpa [#allocation36], 1
    %s2017 = scalar_lea.sflag [#allocation36], 1
    %2018 = vsyncpa %s2017, 1

</llo_original>
